<compile_context>
chip_gen: v7x
topology: tpu7x:2x2x1
jax: 0.10.0
libtpu: 0.0.40
codegen_flags: <defaults>
</compile_context>

<pallas_src>
import jax
import jax.numpy as jnp
from jax import lax
from jax.experimental import pallas as pl
from jax.experimental.pallas import tpu as pltpu

KH = KW = 3
C_IN = 3
C_OUT = 64
K_DIM = KH * KW * C_IN  # 27


def _conv2d_kernel(x_ref, w_ref, b_ref, o_ref):
    # x_ref: (1, H, W, C_IN)        VMEM
    # w_ref: (K_DIM, C_OUT)         VMEM   (HWIO weight flattened: (kh, kw, c) major->minor)
    # b_ref: (1, C_OUT)             VMEM
    # o_ref: (1, Hout, Wout, C_OUT) VMEM
    _, h_out, w_out, c_out = o_ref.shape

    x = x_ref[0]  # (H, W, C_IN) -- single load of the full tile

    # im2col: one pass building (Hout, Wout, KH*KW*C_IN); column order
    # (kh, kw, c) matches the flattened HWIO weight.
    patches = jnp.concatenate(
        [x[kh:kh + h_out, kw:kw + w_out, :]
         for kh in range(KH) for kw in range(KW)],
        axis=-1,
    )
    p2d = patches.reshape(h_out * w_out, K_DIM)  # (Hout*Wout, 27)

    # Single MXU matmul + fused bias add.
    acc = jnp.dot(p2d, w_ref[...], preferred_element_type=jnp.float32)
    acc = acc + b_ref[...]  # (1, C_OUT) broadcasts over rows

    o_ref[...] = acc.reshape(1, h_out, w_out, c_out).astype(o_ref.dtype)


def conv2d_pallas(x_nchw, w_oihw, b):
    """x_nchw: (N, 3, H, W) float32; w_oihw: (64, 3, 3, 3); b: (64,)."""
    n, c, h, w = x_nchw.shape
    assert c == C_IN
    h_out, w_out = h - KH + 1, w - KW + 1

    x_nhwc = jnp.transpose(x_nchw, (0, 2, 3, 1))                   # (N, H, W, Cin)
    # Hoist the weight layout work to trace time: OIHW -> HWIO -> (27, 64).
    w2d = jnp.transpose(w_oihw, (2, 3, 1, 0)).reshape(K_DIM, C_OUT)
    b2d = b.reshape(1, C_OUT)

    out_nhwc = pl.pallas_call(
        _conv2d_kernel,
        out_shape=jax.ShapeDtypeStruct((n, h_out, w_out, C_OUT), x_nchw.dtype),
        grid_spec=pltpu.PrefetchScalarGridSpec(
            num_scalar_prefetch=0,
            grid=(n,),
            in_specs=[
                pl.BlockSpec((1, h, w, C_IN), lambda i: (i, 0, 0, 0)),
                pl.BlockSpec((K_DIM, C_OUT), lambda i: (0, 0)),
                pl.BlockSpec((1, C_OUT), lambda i: (0, 0)),
            ],
            out_specs=pl.BlockSpec((1, h_out, w_out, C_OUT),
                                   lambda i: (i, 0, 0, 0)),
        ),
        compiler_params=pltpu.CompilerParams(
            dimension_semantics=("parallel",)),
    )(x_nhwc, w2d, b2d)

    # TODO(synk): output NCHW transpose stays in the wrapper (lane-width-14
    # stores inside the kernel would be masked vst.msk); keep NHWC end-to-end
    # if the surrounding model allows.
    return jnp.transpose(out_nhwc, (0, 3, 1, 2))                   # back to NCHW


if __name__ == "__main__":
    key = jax.random.PRNGKey(0)
    kx, kw, kb = jax.random.split(key, 3)

    # Deterministic "kaiming-uniform-like" init for Conv2d(3, 64, 3).
    fan_in = C_IN * KH * KW
    bound = 1.0 / jnp.sqrt(fan_in)
    weight = jax.random.uniform(kw, (C_OUT, C_IN, KH, KW),
                                minval=-bound, maxval=bound,
                                dtype=jnp.float32)
    bias = jax.random.uniform(kb, (C_OUT,), minval=-bound, maxval=bound,
                              dtype=jnp.float32)

    # Small NCHW input consistent with the module: (batch=2, C=3, 16, 16).
    x = jax.random.normal(kx, (2, 3, 16, 16), dtype=jnp.float32)

    out = conv2d_pallas(x, weight, bias)
    out = jax.block_until_ready(out)

    # Silent correctness check against XLA's conv (same NCHW/OIHW semantics).
    ref = lax.conv_general_dilated(
        x, weight, window_strides=(1, 1), padding="VALID",
        dimension_numbers=("NCHW", "OIHW", "NCHW")) + bias[None, :, None, None]
    assert out.shape == (2, 64, 14, 14)
    assert jnp.allclose(out, ref, atol=1e-4, rtol=1e-4)

    print("KERNEL_OK")
</pallas_src>

<mosaic_0001>
module attributes {stable_mosaic.version = 11 : i64} {
  func.func @_conv2d_kernel(%arg0: i32, %arg1: memref<1x16x16x3xf32, #tpu.memory_space<vmem>>, %arg2: memref<27x64xf32, #tpu.memory_space<vmem>>, %arg3: memref<1x64xf32, #tpu.memory_space<vmem>>, %arg4: memref<1x14x14x64xf32, #tpu.memory_space<vmem>>) attributes {dimension_semantics = [#tpu.dimension_semantics<parallel>], iteration_bounds = array<i64: 2>, scalar_prefetch = 0 : i64, scratch_operands = 0 : i64, tpu.core_type = #tpu.core_type<tc>, window_params = [{transform_indices = @transform_0, window_bounds = array<i64: 1, 16, 16, 3>}, {pipeline_mode = #tpu.pipeline_mode<synchronous>, transform_indices = @transform_1, window_bounds = array<i64: 27, 64>}, {pipeline_mode = #tpu.pipeline_mode<synchronous>, transform_indices = @transform_2, window_bounds = array<i64: 1, 64>}, {transform_indices = @transform_3, window_bounds = array<i64: 1, 14, 14, 64>}]} {
    %c0 = arith.constant 0 : index
    %c0_0 = arith.constant 0 : index
    %c0_1 = arith.constant 0 : index
    %c0_2 = arith.constant 0 : index
    %0 = vector.load %arg1[%c0, %c0_0, %c0_1, %c0_2] : memref<1x16x16x3xf32, #tpu.memory_space<vmem>>, vector<1x16x16x3xf32>
    %1 = vector.shape_cast %0 : vector<1x16x16x3xf32> to vector<16x16x3xf32>
    %2 = vector.extract_strided_slice %1 {offsets = [0, 0, 0], sizes = [14, 14, 3], strides = [1, 1, 1]} : vector<16x16x3xf32> to vector<14x14x3xf32>
    %3 = vector.extract_strided_slice %1 {offsets = [0, 1, 0], sizes = [14, 14, 3], strides = [1, 1, 1]} : vector<16x16x3xf32> to vector<14x14x3xf32>
    %4 = vector.extract_strided_slice %1 {offsets = [0, 2, 0], sizes = [14, 14, 3], strides = [1, 1, 1]} : vector<16x16x3xf32> to vector<14x14x3xf32>
    %5 = vector.extract_strided_slice %1 {offsets = [1, 0, 0], sizes = [14, 14, 3], strides = [1, 1, 1]} : vector<16x16x3xf32> to vector<14x14x3xf32>
    %6 = vector.extract_strided_slice %1 {offsets = [1, 1, 0], sizes = [14, 14, 3], strides = [1, 1, 1]} : vector<16x16x3xf32> to vector<14x14x3xf32>
    %7 = vector.extract_strided_slice %1 {offsets = [1, 2, 0], sizes = [14, 14, 3], strides = [1, 1, 1]} : vector<16x16x3xf32> to vector<14x14x3xf32>
    %8 = vector.extract_strided_slice %1 {offsets = [2, 0, 0], sizes = [14, 14, 3], strides = [1, 1, 1]} : vector<16x16x3xf32> to vector<14x14x3xf32>
    %9 = vector.extract_strided_slice %1 {offsets = [2, 1, 0], sizes = [14, 14, 3], strides = [1, 1, 1]} : vector<16x16x3xf32> to vector<14x14x3xf32>
    %10 = vector.extract_strided_slice %1 {offsets = [2, 2, 0], sizes = [14, 14, 3], strides = [1, 1, 1]} : vector<16x16x3xf32> to vector<14x14x3xf32>
    %11 = tpu.concatenate %2, %3, %4, %5, %6, %7, %8, %9, %10 in 2 : vector<14x14x3xf32>, vector<14x14x3xf32>, vector<14x14x3xf32>, vector<14x14x3xf32>, vector<14x14x3xf32>, vector<14x14x3xf32>, vector<14x14x3xf32>, vector<14x14x3xf32>, vector<14x14x3xf32> -> vector<14x14x27xf32>
    %12 = vector.shape_cast %11 : vector<14x14x27xf32> to vector<196x27xf32>
    %c0_3 = arith.constant 0 : index
    %c0_4 = arith.constant 0 : index
    %13 = vector.load %arg2[%c0_3, %c0_4] : memref<27x64xf32, #tpu.memory_space<vmem>>, vector<27x64xf32>
    %cst = arith.constant dense<0.000000e+00> : vector<196x64xf32>
    %14 = tpu.matmul %12, %13, %cst {dimension_numbers = #tpu.dot_dimension_numbers<[1], [0], [0], [1], [0, 0, 1, 1], [], []>} : vector<196x27xf32>, vector<27x64xf32>, vector<196x64xf32> -> vector<196x64xf32>
    %c0_5 = arith.constant 0 : index
    %c0_6 = arith.constant 0 : index
    %15 = vector.load %arg3[%c0_5, %c0_6] : memref<1x64xf32, #tpu.memory_space<vmem>>, vector<1x64xf32>
    %16 = vector.broadcast %15 : vector<1x64xf32> to vector<196x64xf32>
    %17 = arith.addf %14, %16 : vector<196x64xf32>
    %18 = vector.shape_cast %17 : vector<196x64xf32> to vector<1x14x14x64xf32>
    %c0_7 = arith.constant 0 : index
    %c0_8 = arith.constant 0 : index
    %c0_9 = arith.constant 0 : index
    %c0_10 = arith.constant 0 : index
    %19 = vector.load %arg4[%c0_7, %c0_8, %c0_9, %c0_10] : memref<1x14x14x64xf32, #tpu.memory_space<vmem>>, vector<1x14x14x64xf32>
    tpu.vector_store %arg4[%c0_7, %c0_8, %c0_9, %c0_10], %18 {strides = array<i32>} : memref<1x14x14x64xf32, #tpu.memory_space<vmem>>, vector<1x14x14x64xf32>,
    return
  }
  func.func @transform_0(%arg0: i32) -> (i32, i32, i32, i32) {
    %c0_i32 = arith.constant 0 : i32
    %c0_i32_0 = arith.constant 0 : i32
    %c0_i32_1 = arith.constant 0 : i32
    %c0_i32_2 = arith.constant 0 : i32
    return %arg0, %c0_i32, %c0_i32_0, %c0_i32_1 : i32, i32, i32, i32
  }
  func.func @transform_1(%arg0: i32) -> (i32, i32) {
    %c0_i32 = arith.constant 0 : i32
    %c0_i32_0 = arith.constant 0 : i32
    %c0_i32_1 = arith.constant 0 : i32
    return %c0_i32, %c0_i32_0 : i32, i32
  }
  func.func @transform_2(%arg0: i32) -> (i32, i32) {
    %c0_i32 = arith.constant 0 : i32
    %c0_i32_0 = arith.constant 0 : i32
    %c0_i32_1 = arith.constant 0 : i32
    return %c0_i32, %c0_i32_0 : i32, i32
  }
  func.func @transform_3(%arg0: i32) -> (i32, i32, i32, i32) {
    %c0_i32 = arith.constant 0 : i32
    %c0_i32_0 = arith.constant 0 : i32
    %c0_i32_1 = arith.constant 0 : i32
    %c0_i32_2 = arith.constant 0 : i32
    return %arg0, %c0_i32, %c0_i32_0, %c0_i32_1 : i32, i32, i32, i32
  }
}

</mosaic_0001>

<llo_original>
// kernel: tpu_custom_call.1
$region0: #{tpu_custom_call.1}
  #allocation0 [shape = 'u32[]', space=smem, size = 0x4, offset = 0x4, fixed_abs, tag = 'smem constant byte address 0x4 - core index']
  #allocation1 [shape = 'u32[144,128]{1,0:T(1,128)}', space=vmem, size = 0x12000, scoped, tag = 'internal scratch']
  %s0 = inlined_call_operand.vmem [shape: f32[2,16,16,3], index: 0, kind: input, shape index: {}]
  %s1 = inlined_call_operand.vmem [shape: f32[27,64], index: 1, kind: input, shape index: {}]
  %s2 = inlined_call_operand.vmem [shape: f32[1,64], index: 2, kind: input, shape index: {}]
  %s3 = inlined_call_operand.vmem [shape: f32[2,14,14,64], index: 3, kind: output, shape index: {}]
  %s4 = sld [smem:[#allocation0]]
  $region45: #{tpu_custom_call.1} parent=0
    _
  %s6 = ssub.s32 1, %s4
  %s7 = scalar_select 0, %s6, %s4
  loop: start=0, step=1, limit=4
  $region2: #{tpu_custom_call.1} parent=0 // loop_pre_header
    _
  $region3: #{tpu_custom_call.1} parent=0 // loop_header
    %s9 = sphi 0, %s13
    %p10 = scmp.ge.s32.totalorder %s9, 4
    %s19 = sphi 0, %s21
    %s22 = sphi 0, %s19
    %s23 = sphi 0, %s22
    %s39 = sphi 0, %s23
    %s43 = sphi 0, %s43
    %s45 = sphi 0, %s43
    %s46 = sphi 0, %s45
    %s60 = sphi 0, %s46
    %s64 = sphi 0, %s64
    %s66 = sphi 0, %s64
    %s67 = sphi 0, %s66
    %s81 = sphi 0, %s67
    %s87 = sphi 0, %s89
    %s90 = sphi 0, %s87
    %s91 = sphi 0, %s90
    %s107 = sphi 0, %s91
  $region4: #{tpu_custom_call.1} parent=0 // loop_header_branch
    %12 = sbr.rel (%p10) target = $region8
  $region5: #{tpu_custom_call.1} parent=0 // loop_body
    %s14 = ssub.s32 %s9, 1
    %s15 = ssub.s32 %s9, 2
    %s16 = sadd.s32 %s9, 1
    %s17 = ssub.s32 %s9, %s16
    %p18 = scmp.eq.s32.totalorder %s17, 0
    %s20 = sadd.s32 %s19, 1
    %s21 = scalar_select %p18, %s19, %s20
    %p24 = pneg %p18
    %p25 = scmp.eq.s32.totalorder %s9, 1
    %p26 = por %p24, %p25
    %p27 = scmp.ne.s32.totalorder %s19, %s22
    %p28 = scmp.eq.s32.totalorder %s9, 0
    %p29 = por %p27, %p28
    %p30 = scmp.ne.s32.totalorder %s19, %s22
    %p31 = scmp.eq.s32.totalorder %s14, 1
    %p32 = por %p30, %p31
    %p33 = scmp.ne.s32.totalorder %s22, %s23
    %p34 = scmp.eq.s32.totalorder %s14, 0
    %p35 = por %p33, %p34
    %p36 = scmp.ne.s32.totalorder %s22, %s23
    %p37 = scmp.eq.s32.totalorder %s15, 1
    %p38 = por %p36, %p37
    %p40 = scmp.ne.s32.totalorder %s23, %s39
    %p41 = scmp.eq.s32.totalorder %s15, 0
    %p42 = por %p40, %p41
    %s44 = sadd.s32 %s43, 1
    %p47 = scmp.eq.s32.totalorder %s9, 1
    %p48 = scmp.ne.s32.totalorder %s43, %s45
    %p49 = scmp.eq.s32.totalorder %s9, 0
    %p50 = por %p48, %p49
    %p51 = scmp.ne.s32.totalorder %s43, %s45
    %p52 = scmp.eq.s32.totalorder %s14, 1
    %p53 = por %p51, %p52
    %p54 = scmp.ne.s32.totalorder %s45, %s46
    %p55 = scmp.eq.s32.totalorder %s14, 0
    %p56 = por %p54, %p55
    %p57 = scmp.ne.s32.totalorder %s45, %s46
    %p58 = scmp.eq.s32.totalorder %s15, 1
    %p59 = por %p57, %p58
    %p61 = scmp.ne.s32.totalorder %s46, %s60
    %p62 = scmp.eq.s32.totalorder %s15, 0
    %p63 = por %p61, %p62
    %s65 = sadd.s32 %s64, 1
    %p68 = scmp.eq.s32.totalorder %s9, 1
    %p69 = scmp.ne.s32.totalorder %s64, %s66
    %p70 = scmp.eq.s32.totalorder %s9, 0
    %p71 = por %p69, %p70
    %p72 = scmp.ne.s32.totalorder %s64, %s66
    %p73 = scmp.eq.s32.totalorder %s14, 1
    %p74 = por %p72, %p73
    %p75 = scmp.ne.s32.totalorder %s66, %s67
    %p76 = scmp.eq.s32.totalorder %s14, 0
    %p77 = por %p75, %p76
    %p78 = scmp.ne.s32.totalorder %s66, %s67
    %p79 = scmp.eq.s32.totalorder %s15, 1
    %p80 = por %p78, %p79
    %p82 = scmp.ne.s32.totalorder %s67, %s81
    %p83 = scmp.eq.s32.totalorder %s15, 0
    %p84 = por %p82, %p83
    %s85 = ssub.s32 %s9, %s16
    %p86 = scmp.eq.s32.totalorder %s85, 0
    %s88 = sadd.s32 %s87, 1
    %s89 = scalar_select %p86, %s87, %s88
    %p92 = pneg %p86
    %p93 = scmp.eq.s32.totalorder %s9, 1
    %p94 = por %p92, %p93
    %p95 = scmp.ne.s32.totalorder %s87, %s90
    %p96 = scmp.eq.s32.totalorder %s9, 0
    %p97 = por %p95, %p96
    %p98 = scmp.ne.s32.totalorder %s87, %s90
    %p99 = scmp.eq.s32.totalorder %s14, 1
    %p100 = por %p98, %p99
    %p101 = scmp.ne.s32.totalorder %s90, %s91
    %p102 = scmp.eq.s32.totalorder %s14, 0
    %p103 = por %p101, %p102
    %p104 = scmp.ne.s32.totalorder %s90, %s91
    %p105 = scmp.eq.s32.totalorder %s15, 1
    %p106 = por %p104, %p105
    %p108 = scmp.ne.s32.totalorder %s91, %s107
    %p109 = scmp.eq.s32.totalorder %s15, 0
    %p110 = por %p108, %p109
    %p111 = scmp.le.s32.totalorder 1, %s9
    %p112 = scmp.lt.s32.totalorder %s9, 3
    %p113 = pnand %p111, %p112
    %p114 = pneg %p113
    // Predicated region
    $region9: #{tpu_custom_call.1} parent=5 // pred_check
      _
    $region10: #{tpu_custom_call.1} parent=5 // pred_check_branch
      %116 = sbr.rel (%p113) target = $region12
    $region11: #{tpu_custom_call.1} parent=5 // pred_region
      %s117 = ssub.s32 %s9, 1
      // Predicated region
      $region13: #{tpu_custom_call.1} parent=11 // pred_check
        %p118 = pneg %p56
      $region14: #{tpu_custom_call.1} parent=11 // pred_check_branch
        %120 = sbr.rel (%p118) target = $region16
      $region15: #{tpu_custom_call.1} parent=11 // pred_region
        _
      $region16: #{tpu_custom_call.1} parent=11 // pred_fallthru
        _
      // Predicated region
      $region17: #{tpu_custom_call.1} parent=11 // pred_check
        %p121 = pneg %p77
      $region18: #{tpu_custom_call.1} parent=11 // pred_check_branch
        %123 = sbr.rel (%p121) target = $region20
      $region19: #{tpu_custom_call.1} parent=11 // pred_region
        _
      $region20: #{tpu_custom_call.1} parent=11 // pred_fallthru
        _
    $region12: #{tpu_custom_call.1} parent=5 // pred_fallthru
      _
    %p124 = scmp.lt.s32.totalorder %s9, 2
    // Predicated region
    $region21: #{tpu_custom_call.1} parent=5 // pred_check
      %p125 = pneg %p124
    $region22: #{tpu_custom_call.1} parent=5 // pred_check_branch
      %127 = sbr.rel (%p125) target = $region24
    $region23: #{tpu_custom_call.1} parent=5 // pred_region
      // Predicated region
      $region25: #{tpu_custom_call.1} parent=23 // pred_check
        %p128 = pneg %p29
      $region26: #{tpu_custom_call.1} parent=23 // pred_check_branch
        %130 = sbr.rel (%p128) target = $region28
      $region27: #{tpu_custom_call.1} parent=23 // pred_region
        %p131 = scmp.lt.s32.totalorder %s9, 1
        %s132 = scalar_select %p131, %s9, 1
        %s133 = smul.addr %s132, 32
        %s134 = smul.addr %s133, 8
        %s135 = scalar_lea.vmem %s0, %s134
      $region28: #{tpu_custom_call.1} parent=23 // pred_fallthru
        _
    $region24: #{tpu_custom_call.1} parent=5 // pred_fallthru
      _
    %p136 = scmp.le.s32.totalorder 1, %s9
    %p137 = scmp.lt.s32.totalorder %s9, 3
    %p138 = pnand %p136, %p137
    %p139 = pneg %p138
    // Predicated region
    $region29: #{tpu_custom_call.1} parent=5 // pred_check
      _
    $region30: #{tpu_custom_call.1} parent=5 // pred_check_branch
      %141 = sbr.rel (%p138) target = $region32
    $region31: #{tpu_custom_call.1} parent=5 // pred_region
      %s142 = ssub.s32 %s9, 1
      %p143 = scmp.lt.s32.totalorder %s14, 1
      %s144 = scalar_select %p143, %s14, 1
      %s145 = smul.addr %s144, 32
      %s146 = smul.addr %s145, 8
      %s147 = scalar_lea.vmem %s0, %s146
      %p148 = pneg %p35
      %p149 = pneg %p32
      %p150 = pneg %p56
      %p151 = pneg %p53
      %p152 = pneg %p77
      %p153 = pneg %p74
      %p154 = pneg %p103
      %p155 = pneg %p100
      %p156 = scmp.lt.s32.totalorder %s14, 1
      %s157 = scalar_select %p156, %s14, 1
      %s158 = smul.addr %s157, 28
      %s159 = smul.addr %s158, 8
      %s160 = scalar_lea.vmem %s3, %s159
      %p161 = scmp.lt.s32.totalorder %s14, 1
      %s162 = scalar_select %p161, %s14, 1
      %s163 = smul.addr %s162, 32
      %s164 = smul.addr %s163, 8
      %s165 = scalar_lea.vmem %s0, %s164
      %p166 = scmp.lt.s32.totalorder %s14, 1
      %s167 = scalar_select %p166, %s14, 1
      %s168 = smul.addr %s167, 28
      %s169 = smul.addr %s168, 8
      %s170 = scalar_lea.vmem %s3, %s169
      %v171 = vld [vmem:[%s165] sm:$0xff]
      %v172 = vld [vmem:[%s165 + $0x8] sm:$0xff]
      %v173 = vld [vmem:[%s165 + $0x10] sm:$0xff]
      %v174 = vld [vmem:[%s165 + $0x18] sm:$0xff]
      %v175 = vld [vmem:[%s165 + $0x20] sm:$0xff]
      %v176 = vld [vmem:[%s165 + $0x28] sm:$0xff]
      %v177 = vld [vmem:[%s165 + $0x30] sm:$0xff]
      %v178 = vld [vmem:[%s165 + $0x38] sm:$0xff]
      %v179 = vld [vmem:[%s165 + $0x40] sm:$0xff]
      %v180 = vld [vmem:[%s165 + $0x48] sm:$0xff]
      %v181 = vld [vmem:[%s165 + $0x50] sm:$0xff]
      %v182 = vld [vmem:[%s165 + $0x58] sm:$0xff]
      %v183 = vld [vmem:[%s165 + $0x60] sm:$0xff]
      %v184 = vld [vmem:[%s165 + $0x68] sm:$0xff]
      %v185 = vld [vmem:[%s165 + $0x70] sm:$0xff]
      %v186 = vld [vmem:[%s165 + $0x78] sm:$0xff]
      %v187 = vld [vmem:[%s165 + $0x80] sm:$0xff]
      %v188 = vld [vmem:[%s165 + $0x88] sm:$0xff]
      %v189 = vld [vmem:[%s165 + $0x90] sm:$0xff]
      %v190 = vld [vmem:[%s165 + $0x98] sm:$0xff]
      %v191 = vld [vmem:[%s165 + $0xa0] sm:$0xff]
      %v192 = vld [vmem:[%s165 + $0xa8] sm:$0xff]
      %v193 = vld [vmem:[%s165 + $0xb0] sm:$0xff]
      %v194 = vld [vmem:[%s165 + $0xb8] sm:$0xff]
      %v195 = vld [vmem:[%s165 + $0xc0] sm:$0xff]
      %v196 = vld [vmem:[%s165 + $0xc8] sm:$0xff]
      %v197 = vld [vmem:[%s165 + $0xd0] sm:$0xff]
      %v198 = vld [vmem:[%s165 + $0xd8] sm:$0xff]
      %v199 = vld [vmem:[%s165 + $0xe0] sm:$0xff]
      %v200 = vld [vmem:[%s165 + $0xe8] sm:$0xff]
      %v201 = vld [vmem:[%s165 + $0xf0] sm:$0xff]
      %v202 = vld [vmem:[%s165 + $0xf8] sm:$0xff]
      %vm231 = vcmask 1046528
      %v232 = vrot.slane %v171, 1
      %v233 = vrot.slane %v172, 1
      %v234 = vsel %vm231, %v232, %v233
      %v235 = vrot.slane %v173, 1
      %v236 = vrot.slane %v174, 1
      %v237 = vsel %vm231, %v235, %v236
      %v238 = vrot.slane %v175, 1
      %v239 = vrot.slane %v176, 1
      %v240 = vsel %vm231, %v238, %v239
      %v241 = vrot.slane %v177, 1
      %v242 = vrot.slane %v178, 1
      %v243 = vsel %vm231, %v241, %v242
      %v244 = vrot.slane %v179, 1
      %v245 = vrot.slane %v180, 1
      %v246 = vsel %vm231, %v244, %v245
      %v247 = vrot.slane %v181, 1
      %v248 = vrot.slane %v182, 1
      %v249 = vsel %vm231, %v247, %v248
      %v250 = vrot.slane %v183, 1
      %v251 = vrot.slane %v184, 1
      %v252 = vsel %vm231, %v250, %v251
      %v253 = vrot.slane %v185, 1
      %v254 = vrot.slane %v186, 1
      %v255 = vsel %vm231, %v253, %v254
      %v256 = vrot.slane %v187, 1
      %v257 = vrot.slane %v188, 1
      %v258 = vsel %vm231, %v256, %v257
      %v259 = vrot.slane %v189, 1
      %v260 = vrot.slane %v190, 1
      %v261 = vsel %vm231, %v259, %v260
      %v262 = vrot.slane %v191, 1
      %v263 = vrot.slane %v192, 1
      %v264 = vsel %vm231, %v262, %v263
      %v265 = vrot.slane %v193, 1
      %v266 = vrot.slane %v194, 1
      %v267 = vsel %vm231, %v265, %v266
      %v268 = vrot.slane %v195, 1
      %v269 = vrot.slane %v196, 1
      %v270 = vsel %vm231, %v268, %v269
      %v271 = vrot.slane %v197, 1
      %v272 = vrot.slane %v198, 1
      %v273 = vsel %vm231, %v271, %v272
      %274 = vrot.lane.b32.xlu0 %v234, 3
      %v275 = vpop.permute.xlu0 %274
      %276 = vrot.lane.b32.xlu0 %v233, 3
      %v277 = vpop.permute.xlu0 %276
      %278 = vrot.lane.b32.xlu0 %v237, 3
      %v279 = vpop.permute.xlu0 %278
      %280 = vrot.lane.b32.xlu0 %v236, 3
      %v281 = vpop.permute.xlu0 %280
      %282 = vrot.lane.b32.xlu0 %v240, 3
      %v283 = vpop.permute.xlu0 %282
      %284 = vrot.lane.b32.xlu0 %v239, 3
      %v285 = vpop.permute.xlu0 %284
      %286 = vrot.lane.b32.xlu0 %v243, 3
      %v287 = vpop.permute.xlu0 %286
      %288 = vrot.lane.b32.xlu0 %v242, 3
      %v289 = vpop.permute.xlu0 %288
      %290 = vrot.lane.b32.xlu0 %v246, 3
      %v291 = vpop.permute.xlu0 %290
      %292 = vrot.lane.b32.xlu0 %v245, 3
      %v293 = vpop.permute.xlu0 %292
      %294 = vrot.lane.b32.xlu0 %v249, 3
      %v295 = vpop.permute.xlu0 %294
      %296 = vrot.lane.b32.xlu0 %v248, 3
      %v297 = vpop.permute.xlu0 %296
      %298 = vrot.lane.b32.xlu0 %v252, 3
      %v299 = vpop.permute.xlu0 %298
      %300 = vrot.lane.b32.xlu0 %v251, 3
      %v301 = vpop.permute.xlu0 %300
      %302 = vrot.lane.b32.xlu0 %v255, 3
      %v303 = vpop.permute.xlu0 %302
      %304 = vrot.lane.b32.xlu0 %v254, 3
      %v305 = vpop.permute.xlu0 %304
      %306 = vrot.lane.b32.xlu0 %v258, 3
      %v307 = vpop.permute.xlu0 %306
      %308 = vrot.lane.b32.xlu0 %v257, 3
      %v309 = vpop.permute.xlu0 %308
      %310 = vrot.lane.b32.xlu0 %v261, 3
      %v311 = vpop.permute.xlu0 %310
      %312 = vrot.lane.b32.xlu0 %v260, 3
      %v313 = vpop.permute.xlu0 %312
      %314 = vrot.lane.b32.xlu0 %v264, 3
      %v315 = vpop.permute.xlu0 %314
      %316 = vrot.lane.b32.xlu0 %v263, 3
      %v317 = vpop.permute.xlu0 %316
      %318 = vrot.lane.b32.xlu0 %v267, 3
      %v319 = vpop.permute.xlu0 %318
      %320 = vrot.lane.b32.xlu0 %v266, 3
      %v321 = vpop.permute.xlu0 %320
      %322 = vrot.lane.b32.xlu0 %v270, 3
      %v323 = vpop.permute.xlu0 %322
      %324 = vrot.lane.b32.xlu0 %v269, 3
      %v325 = vpop.permute.xlu0 %324
      %326 = vrot.lane.b32.xlu0 %v273, 3
      %v327 = vpop.permute.xlu0 %326
      %328 = vrot.lane.b32.xlu0 %v272, 3
      %v329 = vpop.permute.xlu0 %328
      %vm358 = vcmask 1045504
      %v359 = vrot.slane %v171, 2
      %v360 = vrot.slane %v172, 2
      %v361 = vsel %vm358, %v359, %v360
      %v362 = vrot.slane %v173, 2
      %v363 = vrot.slane %v174, 2
      %v364 = vsel %vm358, %v362, %v363
      %v365 = vrot.slane %v175, 2
      %v366 = vrot.slane %v176, 2
      %v367 = vsel %vm358, %v365, %v366
      %v368 = vrot.slane %v177, 2
      %v369 = vrot.slane %v178, 2
      %v370 = vsel %vm358, %v368, %v369
      %v371 = vrot.slane %v179, 2
      %v372 = vrot.slane %v180, 2
      %v373 = vsel %vm358, %v371, %v372
      %v374 = vrot.slane %v181, 2
      %v375 = vrot.slane %v182, 2
      %v376 = vsel %vm358, %v374, %v375
      %v377 = vrot.slane %v183, 2
      %v378 = vrot.slane %v184, 2
      %v379 = vsel %vm358, %v377, %v378
      %v380 = vrot.slane %v185, 2
      %v381 = vrot.slane %v186, 2
      %v382 = vsel %vm358, %v380, %v381
      %v383 = vrot.slane %v187, 2
      %v384 = vrot.slane %v188, 2
      %v385 = vsel %vm358, %v383, %v384
      %v386 = vrot.slane %v189, 2
      %v387 = vrot.slane %v190, 2
      %v388 = vsel %vm358, %v386, %v387
      %v389 = vrot.slane %v191, 2
      %v390 = vrot.slane %v192, 2
      %v391 = vsel %vm358, %v389, %v390
      %v392 = vrot.slane %v193, 2
      %v393 = vrot.slane %v194, 2
      %v394 = vsel %vm358, %v392, %v393
      %v395 = vrot.slane %v195, 2
      %v396 = vrot.slane %v196, 2
      %v397 = vsel %vm358, %v395, %v396
      %v398 = vrot.slane %v197, 2
      %v399 = vrot.slane %v198, 2
      %v400 = vsel %vm358, %v398, %v399
      %401 = vrot.lane.b32.xlu0 %v361, 6
      %v402 = vpop.permute.xlu0 %401
      %403 = vrot.lane.b32.xlu0 %v360, 6
      %v404 = vpop.permute.xlu0 %403
      %405 = vrot.lane.b32.xlu0 %v364, 6
      %v406 = vpop.permute.xlu0 %405
      %407 = vrot.lane.b32.xlu0 %v363, 6
      %v408 = vpop.permute.xlu0 %407
      %409 = vrot.lane.b32.xlu0 %v367, 6
      %v410 = vpop.permute.xlu0 %409
      %411 = vrot.lane.b32.xlu0 %v366, 6
      %v412 = vpop.permute.xlu0 %411
      %413 = vrot.lane.b32.xlu0 %v370, 6
      %v414 = vpop.permute.xlu0 %413
      %415 = vrot.lane.b32.xlu0 %v369, 6
      %v416 = vpop.permute.xlu0 %415
      %417 = vrot.lane.b32.xlu0 %v373, 6
      %v418 = vpop.permute.xlu0 %417
      %419 = vrot.lane.b32.xlu0 %v372, 6
      %v420 = vpop.permute.xlu0 %419
      %421 = vrot.lane.b32.xlu0 %v376, 6
      %v422 = vpop.permute.xlu0 %421
      %423 = vrot.lane.b32.xlu0 %v375, 6
      %v424 = vpop.permute.xlu0 %423
      %425 = vrot.lane.b32.xlu0 %v379, 6
      %v426 = vpop.permute.xlu0 %425
      %427 = vrot.lane.b32.xlu0 %v378, 6
      %v428 = vpop.permute.xlu0 %427
      %429 = vrot.lane.b32.xlu0 %v382, 6
      %v430 = vpop.permute.xlu0 %429
      %431 = vrot.lane.b32.xlu0 %v381, 6
      %v432 = vpop.permute.xlu0 %431
      %433 = vrot.lane.b32.xlu0 %v385, 6
      %v434 = vpop.permute.xlu0 %433
      %435 = vrot.lane.b32.xlu0 %v384, 6
      %v436 = vpop.permute.xlu0 %435
      %437 = vrot.lane.b32.xlu0 %v388, 6
      %v438 = vpop.permute.xlu0 %437
      %439 = vrot.lane.b32.xlu0 %v387, 6
      %v440 = vpop.permute.xlu0 %439
      %441 = vrot.lane.b32.xlu0 %v391, 6
      %v442 = vpop.permute.xlu0 %441
      %443 = vrot.lane.b32.xlu0 %v390, 6
      %v444 = vpop.permute.xlu0 %443
      %445 = vrot.lane.b32.xlu0 %v394, 6
      %v446 = vpop.permute.xlu0 %445
      %447 = vrot.lane.b32.xlu0 %v393, 6
      %v448 = vpop.permute.xlu0 %447
      %449 = vrot.lane.b32.xlu0 %v397, 6
      %v450 = vpop.permute.xlu0 %449
      %451 = vrot.lane.b32.xlu0 %v396, 6
      %v452 = vpop.permute.xlu0 %451
      %453 = vrot.lane.b32.xlu0 %v400, 6
      %v454 = vpop.permute.xlu0 %453
      %455 = vrot.lane.b32.xlu0 %v399, 6
      %v456 = vpop.permute.xlu0 %455
      %487 = vrot.lane.b32.xlu0 %v173, 9
      %v488 = vpop.permute.xlu0 %487
      %489 = vrot.lane.b32.xlu0 %v174, 9
      %v490 = vpop.permute.xlu0 %489
      %491 = vrot.lane.b32.xlu0 %v175, 9
      %v492 = vpop.permute.xlu0 %491
      %493 = vrot.lane.b32.xlu0 %v176, 9
      %v494 = vpop.permute.xlu0 %493
      %495 = vrot.lane.b32.xlu0 %v177, 9
      %v496 = vpop.permute.xlu0 %495
      %497 = vrot.lane.b32.xlu0 %v178, 9
      %v498 = vpop.permute.xlu0 %497
      %499 = vrot.lane.b32.xlu0 %v179, 9
      %v500 = vpop.permute.xlu0 %499
      %501 = vrot.lane.b32.xlu0 %v180, 9
      %v502 = vpop.permute.xlu0 %501
      %503 = vrot.lane.b32.xlu0 %v181, 9
      %v504 = vpop.permute.xlu0 %503
      %505 = vrot.lane.b32.xlu0 %v182, 9
      %v506 = vpop.permute.xlu0 %505
      %507 = vrot.lane.b32.xlu0 %v183, 9
      %v508 = vpop.permute.xlu0 %507
      %509 = vrot.lane.b32.xlu0 %v184, 9
      %v510 = vpop.permute.xlu0 %509
      %511 = vrot.lane.b32.xlu0 %v185, 9
      %v512 = vpop.permute.xlu0 %511
      %513 = vrot.lane.b32.xlu0 %v186, 9
      %v514 = vpop.permute.xlu0 %513
      %515 = vrot.lane.b32.xlu0 %v187, 9
      %v516 = vpop.permute.xlu0 %515
      %517 = vrot.lane.b32.xlu0 %v188, 9
      %v518 = vpop.permute.xlu0 %517
      %519 = vrot.lane.b32.xlu0 %v189, 9
      %v520 = vpop.permute.xlu0 %519
      %521 = vrot.lane.b32.xlu0 %v190, 9
      %v522 = vpop.permute.xlu0 %521
      %523 = vrot.lane.b32.xlu0 %v191, 9
      %v524 = vpop.permute.xlu0 %523
      %525 = vrot.lane.b32.xlu0 %v192, 9
      %v526 = vpop.permute.xlu0 %525
      %527 = vrot.lane.b32.xlu0 %v193, 9
      %v528 = vpop.permute.xlu0 %527
      %529 = vrot.lane.b32.xlu0 %v194, 9
      %v530 = vpop.permute.xlu0 %529
      %531 = vrot.lane.b32.xlu0 %v195, 9
      %v532 = vpop.permute.xlu0 %531
      %533 = vrot.lane.b32.xlu0 %v196, 9
      %v534 = vpop.permute.xlu0 %533
      %535 = vrot.lane.b32.xlu0 %v197, 9
      %v536 = vpop.permute.xlu0 %535
      %537 = vrot.lane.b32.xlu0 %v198, 9
      %v538 = vpop.permute.xlu0 %537
      %539 = vrot.lane.b32.xlu0 %v199, 9
      %v540 = vpop.permute.xlu0 %539
      %541 = vrot.lane.b32.xlu0 %v200, 9
      %v542 = vpop.permute.xlu0 %541
      %v571 = vrot.slane %v199, 1
      %v572 = vrot.slane %v200, 1
      %v573 = vsel %vm231, %v571, %v572
      %574 = vrot.lane.b32.xlu0 %v237, 12
      %v575 = vpop.permute.xlu0 %574
      %576 = vrot.lane.b32.xlu0 %v236, 12
      %v577 = vpop.permute.xlu0 %576
      %578 = vrot.lane.b32.xlu0 %v240, 12
      %v579 = vpop.permute.xlu0 %578
      %580 = vrot.lane.b32.xlu0 %v239, 12
      %v581 = vpop.permute.xlu0 %580
      %582 = vrot.lane.b32.xlu0 %v243, 12
      %v583 = vpop.permute.xlu0 %582
      %584 = vrot.lane.b32.xlu0 %v242, 12
      %v585 = vpop.permute.xlu0 %584
      %586 = vrot.lane.b32.xlu0 %v246, 12
      %v587 = vpop.permute.xlu0 %586
      %588 = vrot.lane.b32.xlu0 %v245, 12
      %v589 = vpop.permute.xlu0 %588
      %590 = vrot.lane.b32.xlu0 %v249, 12
      %v591 = vpop.permute.xlu0 %590
      %592 = vrot.lane.b32.xlu0 %v248, 12
      %v593 = vpop.permute.xlu0 %592
      %594 = vrot.lane.b32.xlu0 %v252, 12
      %v595 = vpop.permute.xlu0 %594
      %596 = vrot.lane.b32.xlu0 %v251, 12
      %v597 = vpop.permute.xlu0 %596
      %598 = vrot.lane.b32.xlu0 %v255, 12
      %v599 = vpop.permute.xlu0 %598
      %600 = vrot.lane.b32.xlu0 %v254, 12
      %v601 = vpop.permute.xlu0 %600
      %602 = vrot.lane.b32.xlu0 %v258, 12
      %v603 = vpop.permute.xlu0 %602
      %604 = vrot.lane.b32.xlu0 %v257, 12
      %v605 = vpop.permute.xlu0 %604
      %606 = vrot.lane.b32.xlu0 %v261, 12
      %v607 = vpop.permute.xlu0 %606
      %608 = vrot.lane.b32.xlu0 %v260, 12
      %v609 = vpop.permute.xlu0 %608
      %610 = vrot.lane.b32.xlu0 %v264, 12
      %v611 = vpop.permute.xlu0 %610
      %612 = vrot.lane.b32.xlu0 %v263, 12
      %v613 = vpop.permute.xlu0 %612
      %614 = vrot.lane.b32.xlu0 %v267, 12
      %v615 = vpop.permute.xlu0 %614
      %616 = vrot.lane.b32.xlu0 %v266, 12
      %v617 = vpop.permute.xlu0 %616
      %618 = vrot.lane.b32.xlu0 %v270, 12
      %v619 = vpop.permute.xlu0 %618
      %620 = vrot.lane.b32.xlu0 %v269, 12
      %v621 = vpop.permute.xlu0 %620
      %622 = vrot.lane.b32.xlu0 %v273, 12
      %v623 = vpop.permute.xlu0 %622
      %624 = vrot.lane.b32.xlu0 %v272, 12
      %v625 = vpop.permute.xlu0 %624
      %626 = vrot.lane.b32.xlu0 %v573, 12
      %v627 = vpop.permute.xlu0 %626
      %628 = vrot.lane.b32.xlu0 %v572, 12
      %v629 = vpop.permute.xlu0 %628
      %v658 = vrot.slane %v199, 2
      %v659 = vrot.slane %v200, 2
      %v660 = vsel %vm358, %v658, %v659
      %661 = vrot.lane.b32.xlu0 %v364, 15
      %v662 = vpop.permute.xlu0 %661
      %663 = vrot.lane.b32.xlu0 %v363, 15
      %v664 = vpop.permute.xlu0 %663
      %665 = vrot.lane.b32.xlu0 %v367, 15
      %v666 = vpop.permute.xlu0 %665
      %667 = vrot.lane.b32.xlu0 %v366, 15
      %v668 = vpop.permute.xlu0 %667
      %669 = vrot.lane.b32.xlu0 %v370, 15
      %v670 = vpop.permute.xlu0 %669
      %671 = vrot.lane.b32.xlu0 %v369, 15
      %v672 = vpop.permute.xlu0 %671
      %673 = vrot.lane.b32.xlu0 %v373, 15
      %v674 = vpop.permute.xlu0 %673
      %675 = vrot.lane.b32.xlu0 %v372, 15
      %v676 = vpop.permute.xlu0 %675
      %677 = vrot.lane.b32.xlu0 %v376, 15
      %v678 = vpop.permute.xlu0 %677
      %679 = vrot.lane.b32.xlu0 %v375, 15
      %v680 = vpop.permute.xlu0 %679
      %681 = vrot.lane.b32.xlu0 %v379, 15
      %v682 = vpop.permute.xlu0 %681
      %683 = vrot.lane.b32.xlu0 %v378, 15
      %v684 = vpop.permute.xlu0 %683
      %685 = vrot.lane.b32.xlu0 %v382, 15
      %v686 = vpop.permute.xlu0 %685
      %687 = vrot.lane.b32.xlu0 %v381, 15
      %v688 = vpop.permute.xlu0 %687
      %689 = vrot.lane.b32.xlu0 %v385, 15
      %v690 = vpop.permute.xlu0 %689
      %691 = vrot.lane.b32.xlu0 %v384, 15
      %v692 = vpop.permute.xlu0 %691
      %693 = vrot.lane.b32.xlu0 %v388, 15
      %v694 = vpop.permute.xlu0 %693
      %695 = vrot.lane.b32.xlu0 %v387, 15
      %v696 = vpop.permute.xlu0 %695
      %697 = vrot.lane.b32.xlu0 %v391, 15
      %v698 = vpop.permute.xlu0 %697
      %699 = vrot.lane.b32.xlu0 %v390, 15
      %v700 = vpop.permute.xlu0 %699
      %701 = vrot.lane.b32.xlu0 %v394, 15
      %v702 = vpop.permute.xlu0 %701
      %703 = vrot.lane.b32.xlu0 %v393, 15
      %v704 = vpop.permute.xlu0 %703
      %705 = vrot.lane.b32.xlu0 %v397, 15
      %v706 = vpop.permute.xlu0 %705
      %707 = vrot.lane.b32.xlu0 %v396, 15
      %v708 = vpop.permute.xlu0 %707
      %709 = vrot.lane.b32.xlu0 %v400, 15
      %v710 = vpop.permute.xlu0 %709
      %711 = vrot.lane.b32.xlu0 %v399, 15
      %v712 = vpop.permute.xlu0 %711
      %713 = vrot.lane.b32.xlu0 %v660, 15
      %v714 = vpop.permute.xlu0 %713
      %715 = vrot.lane.b32.xlu0 %v659, 15
      %v716 = vpop.permute.xlu0 %715
      %747 = vrot.lane.b32.xlu0 %v175, 18
      %v748 = vpop.permute.xlu0 %747
      %749 = vrot.lane.b32.xlu0 %v176, 18
      %v750 = vpop.permute.xlu0 %749
      %751 = vrot.lane.b32.xlu0 %v177, 18
      %v752 = vpop.permute.xlu0 %751
      %753 = vrot.lane.b32.xlu0 %v178, 18
      %v754 = vpop.permute.xlu0 %753
      %755 = vrot.lane.b32.xlu0 %v179, 18
      %v756 = vpop.permute.xlu0 %755
      %757 = vrot.lane.b32.xlu0 %v180, 18
      %v758 = vpop.permute.xlu0 %757
      %759 = vrot.lane.b32.xlu0 %v181, 18
      %v760 = vpop.permute.xlu0 %759
      %761 = vrot.lane.b32.xlu0 %v182, 18
      %v762 = vpop.permute.xlu0 %761
      %763 = vrot.lane.b32.xlu0 %v183, 18
      %v764 = vpop.permute.xlu0 %763
      %765 = vrot.lane.b32.xlu0 %v184, 18
      %v766 = vpop.permute.xlu0 %765
      %767 = vrot.lane.b32.xlu0 %v185, 18
      %v768 = vpop.permute.xlu0 %767
      %769 = vrot.lane.b32.xlu0 %v186, 18
      %v770 = vpop.permute.xlu0 %769
      %771 = vrot.lane.b32.xlu0 %v187, 18
      %v772 = vpop.permute.xlu0 %771
      %773 = vrot.lane.b32.xlu0 %v188, 18
      %v774 = vpop.permute.xlu0 %773
      %775 = vrot.lane.b32.xlu0 %v189, 18
      %v776 = vpop.permute.xlu0 %775
      %777 = vrot.lane.b32.xlu0 %v190, 18
      %v778 = vpop.permute.xlu0 %777
      %779 = vrot.lane.b32.xlu0 %v191, 18
      %v780 = vpop.permute.xlu0 %779
      %781 = vrot.lane.b32.xlu0 %v192, 18
      %v782 = vpop.permute.xlu0 %781
      %783 = vrot.lane.b32.xlu0 %v193, 18
      %v784 = vpop.permute.xlu0 %783
      %785 = vrot.lane.b32.xlu0 %v194, 18
      %v786 = vpop.permute.xlu0 %785
      %787 = vrot.lane.b32.xlu0 %v195, 18
      %v788 = vpop.permute.xlu0 %787
      %789 = vrot.lane.b32.xlu0 %v196, 18
      %v790 = vpop.permute.xlu0 %789
      %791 = vrot.lane.b32.xlu0 %v197, 18
      %v792 = vpop.permute.xlu0 %791
      %793 = vrot.lane.b32.xlu0 %v198, 18
      %v794 = vpop.permute.xlu0 %793
      %795 = vrot.lane.b32.xlu0 %v199, 18
      %v796 = vpop.permute.xlu0 %795
      %797 = vrot.lane.b32.xlu0 %v200, 18
      %v798 = vpop.permute.xlu0 %797
      %799 = vrot.lane.b32.xlu0 %v201, 18
      %v800 = vpop.permute.xlu0 %799
      %801 = vrot.lane.b32.xlu0 %v202, 18
      %v802 = vpop.permute.xlu0 %801
      %v831 = vrot.slane %v201, 1
      %v832 = vrot.slane %v202, 1
      %v833 = vsel %vm231, %v831, %v832
      %834 = vrot.lane.b32.xlu0 %v240, 21
      %v835 = vpop.permute.xlu0 %834
      %836 = vrot.lane.b32.xlu0 %v239, 21
      %v837 = vpop.permute.xlu0 %836
      %838 = vrot.lane.b32.xlu0 %v243, 21
      %v839 = vpop.permute.xlu0 %838
      %840 = vrot.lane.b32.xlu0 %v242, 21
      %v841 = vpop.permute.xlu0 %840
      %842 = vrot.lane.b32.xlu0 %v246, 21
      %v843 = vpop.permute.xlu0 %842
      %844 = vrot.lane.b32.xlu0 %v245, 21
      %v845 = vpop.permute.xlu0 %844
      %846 = vrot.lane.b32.xlu0 %v249, 21
      %v847 = vpop.permute.xlu0 %846
      %848 = vrot.lane.b32.xlu0 %v248, 21
      %v849 = vpop.permute.xlu0 %848
      %850 = vrot.lane.b32.xlu0 %v252, 21
      %v851 = vpop.permute.xlu0 %850
      %852 = vrot.lane.b32.xlu0 %v251, 21
      %v853 = vpop.permute.xlu0 %852
      %854 = vrot.lane.b32.xlu0 %v255, 21
      %v855 = vpop.permute.xlu0 %854
      %856 = vrot.lane.b32.xlu0 %v254, 21
      %v857 = vpop.permute.xlu0 %856
      %858 = vrot.lane.b32.xlu0 %v258, 21
      %v859 = vpop.permute.xlu0 %858
      %860 = vrot.lane.b32.xlu0 %v257, 21
      %v861 = vpop.permute.xlu0 %860
      %862 = vrot.lane.b32.xlu0 %v261, 21
      %v863 = vpop.permute.xlu0 %862
      %864 = vrot.lane.b32.xlu0 %v260, 21
      %v865 = vpop.permute.xlu0 %864
      %866 = vrot.lane.b32.xlu0 %v264, 21
      %v867 = vpop.permute.xlu0 %866
      %868 = vrot.lane.b32.xlu0 %v263, 21
      %v869 = vpop.permute.xlu0 %868
      %870 = vrot.lane.b32.xlu0 %v267, 21
      %v871 = vpop.permute.xlu0 %870
      %872 = vrot.lane.b32.xlu0 %v266, 21
      %v873 = vpop.permute.xlu0 %872
      %874 = vrot.lane.b32.xlu0 %v270, 21
      %v875 = vpop.permute.xlu0 %874
      %876 = vrot.lane.b32.xlu0 %v269, 21
      %v877 = vpop.permute.xlu0 %876
      %878 = vrot.lane.b32.xlu0 %v273, 21
      %v879 = vpop.permute.xlu0 %878
      %880 = vrot.lane.b32.xlu0 %v272, 21
      %v881 = vpop.permute.xlu0 %880
      %882 = vrot.lane.b32.xlu0 %v573, 21
      %v883 = vpop.permute.xlu0 %882
      %884 = vrot.lane.b32.xlu0 %v572, 21
      %v885 = vpop.permute.xlu0 %884
      %886 = vrot.lane.b32.xlu0 %v833, 21
      %v887 = vpop.permute.xlu0 %886
      %888 = vrot.lane.b32.xlu0 %v832, 21
      %v889 = vpop.permute.xlu0 %888
      %v918 = vrot.slane %v201, 2
      %v919 = vrot.slane %v202, 2
      %v920 = vsel %vm358, %v918, %v919
      %921 = vrot.lane.b32.xlu0 %v367, 24
      %v922 = vpop.permute.xlu0 %921
      %923 = vrot.lane.b32.xlu0 %v366, 24
      %v924 = vpop.permute.xlu0 %923
      %925 = vrot.lane.b32.xlu0 %v370, 24
      %v926 = vpop.permute.xlu0 %925
      %927 = vrot.lane.b32.xlu0 %v369, 24
      %v928 = vpop.permute.xlu0 %927
      %929 = vrot.lane.b32.xlu0 %v373, 24
      %v930 = vpop.permute.xlu0 %929
      %931 = vrot.lane.b32.xlu0 %v372, 24
      %v932 = vpop.permute.xlu0 %931
      %933 = vrot.lane.b32.xlu0 %v376, 24
      %v934 = vpop.permute.xlu0 %933
      %935 = vrot.lane.b32.xlu0 %v375, 24
      %v936 = vpop.permute.xlu0 %935
      %937 = vrot.lane.b32.xlu0 %v379, 24
      %v938 = vpop.permute.xlu0 %937
      %939 = vrot.lane.b32.xlu0 %v378, 24
      %v940 = vpop.permute.xlu0 %939
      %941 = vrot.lane.b32.xlu0 %v382, 24
      %v942 = vpop.permute.xlu0 %941
      %943 = vrot.lane.b32.xlu0 %v381, 24
      %v944 = vpop.permute.xlu0 %943
      %945 = vrot.lane.b32.xlu0 %v385, 24
      %v946 = vpop.permute.xlu0 %945
      %947 = vrot.lane.b32.xlu0 %v384, 24
      %v948 = vpop.permute.xlu0 %947
      %949 = vrot.lane.b32.xlu0 %v388, 24
      %v950 = vpop.permute.xlu0 %949
      %951 = vrot.lane.b32.xlu0 %v387, 24
      %v952 = vpop.permute.xlu0 %951
      %953 = vrot.lane.b32.xlu0 %v391, 24
      %v954 = vpop.permute.xlu0 %953
      %955 = vrot.lane.b32.xlu0 %v390, 24
      %v956 = vpop.permute.xlu0 %955
      %957 = vrot.lane.b32.xlu0 %v394, 24
      %v958 = vpop.permute.xlu0 %957
      %959 = vrot.lane.b32.xlu0 %v393, 24
      %v960 = vpop.permute.xlu0 %959
      %961 = vrot.lane.b32.xlu0 %v397, 24
      %v962 = vpop.permute.xlu0 %961
      %963 = vrot.lane.b32.xlu0 %v396, 24
      %v964 = vpop.permute.xlu0 %963
      %965 = vrot.lane.b32.xlu0 %v400, 24
      %v966 = vpop.permute.xlu0 %965
      %967 = vrot.lane.b32.xlu0 %v399, 24
      %v968 = vpop.permute.xlu0 %967
      %969 = vrot.lane.b32.xlu0 %v660, 24
      %v970 = vpop.permute.xlu0 %969
      %971 = vrot.lane.b32.xlu0 %v659, 24
      %v972 = vpop.permute.xlu0 %971
      %973 = vrot.lane.b32.xlu0 %v920, 24
      %v974 = vpop.permute.xlu0 %973
      %975 = vrot.lane.b32.xlu0 %v919, 24
      %v976 = vpop.permute.xlu0 %975
      %vm1005 = vcmask 23552
      %v1006 = vsel %vm1005, %v171, %v275
      %v1007 = vsel %vm1005, %v172, %v277
      %v1008 = vsel %vm1005, %v173, %v279
      %v1009 = vsel %vm1005, %v174, %v281
      %v1010 = vsel %vm1005, %v175, %v283
      %v1011 = vsel %vm1005, %v176, %v285
      %v1012 = vsel %vm1005, %v177, %v287
      %v1013 = vsel %vm1005, %v178, %v289
      %v1014 = vsel %vm1005, %v179, %v291
      %v1015 = vsel %vm1005, %v180, %v293
      %v1016 = vsel %vm1005, %v181, %v295
      %v1017 = vsel %vm1005, %v182, %v297
      %v1018 = vsel %vm1005, %v183, %v299
      %v1019 = vsel %vm1005, %v184, %v301
      %v1020 = vsel %vm1005, %v185, %v303
      %v1021 = vsel %vm1005, %v186, %v305
      %v1022 = vsel %vm1005, %v187, %v307
      %v1023 = vsel %vm1005, %v188, %v309
      %v1024 = vsel %vm1005, %v189, %v311
      %v1025 = vsel %vm1005, %v190, %v313
      %v1026 = vsel %vm1005, %v191, %v315
      %v1027 = vsel %vm1005, %v192, %v317
      %v1028 = vsel %vm1005, %v193, %v319
      %v1029 = vsel %vm1005, %v194, %v321
      %v1030 = vsel %vm1005, %v195, %v323
      %v1031 = vsel %vm1005, %v196, %v325
      %v1032 = vsel %vm1005, %v197, %v327
      %v1033 = vsel %vm1005, %v198, %v329
      %vm1034 = vcmask 48128
      %v1035 = vsel %vm1034, %v1006, %v402
      %v1036 = vsel %vm1034, %v1007, %v404
      %v1037 = vsel %vm1034, %v1008, %v406
      %v1038 = vsel %vm1034, %v1009, %v408
      %v1039 = vsel %vm1034, %v1010, %v410
      %v1040 = vsel %vm1034, %v1011, %v412
      %v1041 = vsel %vm1034, %v1012, %v414
      %v1042 = vsel %vm1034, %v1013, %v416
      %v1043 = vsel %vm1034, %v1014, %v418
      %v1044 = vsel %vm1034, %v1015, %v420
      %v1045 = vsel %vm1034, %v1016, %v422
      %v1046 = vsel %vm1034, %v1017, %v424
      %v1047 = vsel %vm1034, %v1018, %v426
      %v1048 = vsel %vm1034, %v1019, %v428
      %v1049 = vsel %vm1034, %v1020, %v430
      %v1050 = vsel %vm1034, %v1021, %v432
      %v1051 = vsel %vm1034, %v1022, %v434
      %v1052 = vsel %vm1034, %v1023, %v436
      %v1053 = vsel %vm1034, %v1024, %v438
      %v1054 = vsel %vm1034, %v1025, %v440
      %v1055 = vsel %vm1034, %v1026, %v442
      %v1056 = vsel %vm1034, %v1027, %v444
      %v1057 = vsel %vm1034, %v1028, %v446
      %v1058 = vsel %vm1034, %v1029, %v448
      %v1059 = vsel %vm1034, %v1030, %v450
      %v1060 = vsel %vm1034, %v1031, %v452
      %v1061 = vsel %vm1034, %v1032, %v454
      %v1062 = vsel %vm1034, %v1033, %v456
      %vm1063 = vcmask 72704
      %v1064 = vsel %vm1063, %v1035, %v488
      %v1065 = vsel %vm1063, %v1036, %v490
      %v1066 = vsel %vm1063, %v1037, %v492
      %v1067 = vsel %vm1063, %v1038, %v494
      %v1068 = vsel %vm1063, %v1039, %v496
      %v1069 = vsel %vm1063, %v1040, %v498
      %v1070 = vsel %vm1063, %v1041, %v500
      %v1071 = vsel %vm1063, %v1042, %v502
      %v1072 = vsel %vm1063, %v1043, %v504
      %v1073 = vsel %vm1063, %v1044, %v506
      %v1074 = vsel %vm1063, %v1045, %v508
      %v1075 = vsel %vm1063, %v1046, %v510
      %v1076 = vsel %vm1063, %v1047, %v512
      %v1077 = vsel %vm1063, %v1048, %v514
      %v1078 = vsel %vm1063, %v1049, %v516
      %v1079 = vsel %vm1063, %v1050, %v518
      %v1080 = vsel %vm1063, %v1051, %v520
      %v1081 = vsel %vm1063, %v1052, %v522
      %v1082 = vsel %vm1063, %v1053, %v524
      %v1083 = vsel %vm1063, %v1054, %v526
      %v1084 = vsel %vm1063, %v1055, %v528
      %v1085 = vsel %vm1063, %v1056, %v530
      %v1086 = vsel %vm1063, %v1057, %v532
      %v1087 = vsel %vm1063, %v1058, %v534
      %v1088 = vsel %vm1063, %v1059, %v536
      %v1089 = vsel %vm1063, %v1060, %v538
      %v1090 = vsel %vm1063, %v1061, %v540
      %v1091 = vsel %vm1063, %v1062, %v542
      %vm1092 = vcmask 97280
      %v1093 = vsel %vm1092, %v1064, %v575
      %v1094 = vsel %vm1092, %v1065, %v577
      %v1095 = vsel %vm1092, %v1066, %v579
      %v1096 = vsel %vm1092, %v1067, %v581
      %v1097 = vsel %vm1092, %v1068, %v583
      %v1098 = vsel %vm1092, %v1069, %v585
      %v1099 = vsel %vm1092, %v1070, %v587
      %v1100 = vsel %vm1092, %v1071, %v589
      %v1101 = vsel %vm1092, %v1072, %v591
      %v1102 = vsel %vm1092, %v1073, %v593
      %v1103 = vsel %vm1092, %v1074, %v595
      %v1104 = vsel %vm1092, %v1075, %v597
      %v1105 = vsel %vm1092, %v1076, %v599
      %v1106 = vsel %vm1092, %v1077, %v601
      %v1107 = vsel %vm1092, %v1078, %v603
      %v1108 = vsel %vm1092, %v1079, %v605
      %v1109 = vsel %vm1092, %v1080, %v607
      %v1110 = vsel %vm1092, %v1081, %v609
      %v1111 = vsel %vm1092, %v1082, %v611
      %v1112 = vsel %vm1092, %v1083, %v613
      %v1113 = vsel %vm1092, %v1084, %v615
      %v1114 = vsel %vm1092, %v1085, %v617
      %v1115 = vsel %vm1092, %v1086, %v619
      %v1116 = vsel %vm1092, %v1087, %v621
      %v1117 = vsel %vm1092, %v1088, %v623
      %v1118 = vsel %vm1092, %v1089, %v625
      %v1119 = vsel %vm1092, %v1090, %v627
      %v1120 = vsel %vm1092, %v1091, %v629
      %vm1121 = vcmask 121856
      %v1122 = vsel %vm1121, %v1093, %v662
      %v1123 = vsel %vm1121, %v1094, %v664
      %v1124 = vsel %vm1121, %v1095, %v666
      %v1125 = vsel %vm1121, %v1096, %v668
      %v1126 = vsel %vm1121, %v1097, %v670
      %v1127 = vsel %vm1121, %v1098, %v672
      %v1128 = vsel %vm1121, %v1099, %v674
      %v1129 = vsel %vm1121, %v1100, %v676
      %v1130 = vsel %vm1121, %v1101, %v678
      %v1131 = vsel %vm1121, %v1102, %v680
      %v1132 = vsel %vm1121, %v1103, %v682
      %v1133 = vsel %vm1121, %v1104, %v684
      %v1134 = vsel %vm1121, %v1105, %v686
      %v1135 = vsel %vm1121, %v1106, %v688
      %v1136 = vsel %vm1121, %v1107, %v690
      %v1137 = vsel %vm1121, %v1108, %v692
      %v1138 = vsel %vm1121, %v1109, %v694
      %v1139 = vsel %vm1121, %v1110, %v696
      %v1140 = vsel %vm1121, %v1111, %v698
      %v1141 = vsel %vm1121, %v1112, %v700
      %v1142 = vsel %vm1121, %v1113, %v702
      %v1143 = vsel %vm1121, %v1114, %v704
      %v1144 = vsel %vm1121, %v1115, %v706
      %v1145 = vsel %vm1121, %v1116, %v708
      %v1146 = vsel %vm1121, %v1117, %v710
      %v1147 = vsel %vm1121, %v1118, %v712
      %v1148 = vsel %vm1121, %v1119, %v714
      %v1149 = vsel %vm1121, %v1120, %v716
      %vm1150 = vcmask 146432
      %v1151 = vsel %vm1150, %v1122, %v748
      %v1152 = vsel %vm1150, %v1123, %v750
      %v1153 = vsel %vm1150, %v1124, %v752
      %v1154 = vsel %vm1150, %v1125, %v754
      %v1155 = vsel %vm1150, %v1126, %v756
      %v1156 = vsel %vm1150, %v1127, %v758
      %v1157 = vsel %vm1150, %v1128, %v760
      %v1158 = vsel %vm1150, %v1129, %v762
      %v1159 = vsel %vm1150, %v1130, %v764
      %v1160 = vsel %vm1150, %v1131, %v766
      %v1161 = vsel %vm1150, %v1132, %v768
      %v1162 = vsel %vm1150, %v1133, %v770
      %v1163 = vsel %vm1150, %v1134, %v772
      %v1164 = vsel %vm1150, %v1135, %v774
      %v1165 = vsel %vm1150, %v1136, %v776
      %v1166 = vsel %vm1150, %v1137, %v778
      %v1167 = vsel %vm1150, %v1138, %v780
      %v1168 = vsel %vm1150, %v1139, %v782
      %v1169 = vsel %vm1150, %v1140, %v784
      %v1170 = vsel %vm1150, %v1141, %v786
      %v1171 = vsel %vm1150, %v1142, %v788
      %v1172 = vsel %vm1150, %v1143, %v790
      %v1173 = vsel %vm1150, %v1144, %v792
      %v1174 = vsel %vm1150, %v1145, %v794
      %v1175 = vsel %vm1150, %v1146, %v796
      %v1176 = vsel %vm1150, %v1147, %v798
      %v1177 = vsel %vm1150, %v1148, %v800
      %v1178 = vsel %vm1150, %v1149, %v802
      %vm1179 = vcmask 171008
      %v1180 = vsel %vm1179, %v1151, %v835
      %v1181 = vsel %vm1179, %v1152, %v837
      %v1182 = vsel %vm1179, %v1153, %v839
      %v1183 = vsel %vm1179, %v1154, %v841
      %v1184 = vsel %vm1179, %v1155, %v843
      %v1185 = vsel %vm1179, %v1156, %v845
      %v1186 = vsel %vm1179, %v1157, %v847
      %v1187 = vsel %vm1179, %v1158, %v849
      %v1188 = vsel %vm1179, %v1159, %v851
      %v1189 = vsel %vm1179, %v1160, %v853
      %v1190 = vsel %vm1179, %v1161, %v855
      %v1191 = vsel %vm1179, %v1162, %v857
      %v1192 = vsel %vm1179, %v1163, %v859
      %v1193 = vsel %vm1179, %v1164, %v861
      %v1194 = vsel %vm1179, %v1165, %v863
      %v1195 = vsel %vm1179, %v1166, %v865
      %v1196 = vsel %vm1179, %v1167, %v867
      %v1197 = vsel %vm1179, %v1168, %v869
      %v1198 = vsel %vm1179, %v1169, %v871
      %v1199 = vsel %vm1179, %v1170, %v873
      %v1200 = vsel %vm1179, %v1171, %v875
      %v1201 = vsel %vm1179, %v1172, %v877
      %v1202 = vsel %vm1179, %v1173, %v879
      %v1203 = vsel %vm1179, %v1174, %v881
      %v1204 = vsel %vm1179, %v1175, %v883
      %v1205 = vsel %vm1179, %v1176, %v885
      %v1206 = vsel %vm1179, %v1177, %v887
      %v1207 = vsel %vm1179, %v1178, %v889
      %vm1208 = vcmask 195584
      %v1209 = vsel %vm1208, %v1180, %v922
      %v1210 = vsel %vm1208, %v1181, %v924
      %v1211 = vsel %vm1208, %v1182, %v926
      %v1212 = vsel %vm1208, %v1183, %v928
      %v1213 = vsel %vm1208, %v1184, %v930
      %v1214 = vsel %vm1208, %v1185, %v932
      %v1215 = vsel %vm1208, %v1186, %v934
      %v1216 = vsel %vm1208, %v1187, %v936
      %v1217 = vsel %vm1208, %v1188, %v938
      %v1218 = vsel %vm1208, %v1189, %v940
      %v1219 = vsel %vm1208, %v1190, %v942
      %v1220 = vsel %vm1208, %v1191, %v944
      %v1221 = vsel %vm1208, %v1192, %v946
      %v1222 = vsel %vm1208, %v1193, %v948
      %v1223 = vsel %vm1208, %v1194, %v950
      %v1224 = vsel %vm1208, %v1195, %v952
      %v1225 = vsel %vm1208, %v1196, %v954
      %v1226 = vsel %vm1208, %v1197, %v956
      %v1227 = vsel %vm1208, %v1198, %v958
      %v1228 = vsel %vm1208, %v1199, %v960
      %v1229 = vsel %vm1208, %v1200, %v962
      %v1230 = vsel %vm1208, %v1201, %v964
      %v1231 = vsel %vm1208, %v1202, %v966
      %v1232 = vsel %vm1208, %v1203, %v968
      %v1233 = vsel %vm1208, %v1204, %v970
      %v1234 = vsel %vm1208, %v1205, %v972
      %v1235 = vsel %vm1208, %v1206, %v974
      %v1236 = vsel %vm1208, %v1207, %v976
      %v1265 = vcombine.high %v1209, %v1209
      %v1267 = vunpack.c.l.s4 1983009808
      %v1268 = vunpack.c.0.s8 %v1267
      %v1269 = vlaneseq
      %v1270 = vshrl.u32 %v1269, 7
      %v1271 = vsub.s32 %v1268, %v1270
      %v1272 = vrot.slane %v1209, %v1271
      %v1274 = vunpack.c.l.s4 1983009808
      %v1275 = vunpack.c.0.s8 %v1274
      %v1276 = vlaneseq
      %v1277 = vshrl.u32 %v1276, 7
      %v1278 = vsub.s32 %v1275, %v1277
      %v1279 = vrot.slane %v1265, %v1278
      %v1280 = vcombine.high %v1272, %v1272
      %v1281 = vcombine.high %v1279, %v1279
      %v1282 = vcombine.high %v1210, %v1210
      %v1284 = vunpack.c.l.s4 1983009808
      %v1285 = vunpack.c.0.s8 %v1284
      %v1286 = vlaneseq
      %v1287 = vshrl.u32 %v1286, 7
      %v1288 = vsub.s32 %v1285, %v1287
      %v1289 = vrot.slane %v1210, %v1288
      %v1291 = vunpack.c.l.s4 1983009808
      %v1292 = vunpack.c.0.s8 %v1291
      %v1293 = vlaneseq
      %v1294 = vshrl.u32 %v1293, 7
      %v1295 = vsub.s32 %v1292, %v1294
      %v1296 = vrot.slane %v1282, %v1295
      %v1297 = vcombine.high %v1289, %v1289
      %v1298 = vcombine.high %v1211, %v1211
      %v1300 = vunpack.c.l.s4 1983009808
      %v1301 = vunpack.c.0.s8 %v1300
      %v1302 = vlaneseq
      %v1303 = vshrl.u32 %v1302, 7
      %v1304 = vsub.s32 %v1301, %v1303
      %v1305 = vrot.slane %v1211, %v1304
      %v1307 = vunpack.c.l.s4 1983009808
      %v1308 = vunpack.c.0.s8 %v1307
      %v1309 = vlaneseq
      %v1310 = vshrl.u32 %v1309, 7
      %v1311 = vsub.s32 %v1308, %v1310
      %v1312 = vrot.slane %v1298, %v1311
      %v1313 = vcombine.high %v1305, %v1305
      %v1314 = vcombine.high %v1312, %v1312
      %v1315 = vcombine.high %v1212, %v1212
      %v1317 = vunpack.c.l.s4 1983009808
      %v1318 = vunpack.c.0.s8 %v1317
      %v1319 = vlaneseq
      %v1320 = vshrl.u32 %v1319, 7
      %v1321 = vsub.s32 %v1318, %v1320
      %v1322 = vrot.slane %v1212, %v1321
      %v1324 = vunpack.c.l.s4 1983009808
      %v1325 = vunpack.c.0.s8 %v1324
      %v1326 = vlaneseq
      %v1327 = vshrl.u32 %v1326, 7
      %v1328 = vsub.s32 %v1325, %v1327
      %v1329 = vrot.slane %v1315, %v1328
      %v1330 = vcombine.high %v1322, %v1322
      %v1331 = vcombine.high %v1213, %v1213
      %v1333 = vunpack.c.l.s4 1983009808
      %v1334 = vunpack.c.0.s8 %v1333
      %v1335 = vlaneseq
      %v1336 = vshrl.u32 %v1335, 7
      %v1337 = vsub.s32 %v1334, %v1336
      %v1338 = vrot.slane %v1213, %v1337
      %v1340 = vunpack.c.l.s4 1983009808
      %v1341 = vunpack.c.0.s8 %v1340
      %v1342 = vlaneseq
      %v1343 = vshrl.u32 %v1342, 7
      %v1344 = vsub.s32 %v1341, %v1343
      %v1345 = vrot.slane %v1331, %v1344
      %v1346 = vcombine.high %v1338, %v1338
      %v1347 = vcombine.high %v1345, %v1345
      %v1348 = vcombine.high %v1214, %v1214
      %v1350 = vunpack.c.l.s4 1983009808
      %v1351 = vunpack.c.0.s8 %v1350
      %v1352 = vlaneseq
      %v1353 = vshrl.u32 %v1352, 7
      %v1354 = vsub.s32 %v1351, %v1353
      %v1355 = vrot.slane %v1214, %v1354
      %v1357 = vunpack.c.l.s4 1983009808
      %v1358 = vunpack.c.0.s8 %v1357
      %v1359 = vlaneseq
      %v1360 = vshrl.u32 %v1359, 7
      %v1361 = vsub.s32 %v1358, %v1360
      %v1362 = vrot.slane %v1348, %v1361
      %v1363 = vcombine.high %v1355, %v1355
      %v1364 = vcombine.high %v1215, %v1215
      %v1366 = vunpack.c.l.s4 1983009808
      %v1367 = vunpack.c.0.s8 %v1366
      %v1368 = vlaneseq
      %v1369 = vshrl.u32 %v1368, 7
      %v1370 = vsub.s32 %v1367, %v1369
      %v1371 = vrot.slane %v1215, %v1370
      %v1373 = vunpack.c.l.s4 1983009808
      %v1374 = vunpack.c.0.s8 %v1373
      %v1375 = vlaneseq
      %v1376 = vshrl.u32 %v1375, 7
      %v1377 = vsub.s32 %v1374, %v1376
      %v1378 = vrot.slane %v1364, %v1377
      %v1379 = vcombine.high %v1371, %v1371
      %v1380 = vcombine.high %v1378, %v1378
      %v1381 = vcombine.high %v1216, %v1216
      %v1383 = vunpack.c.l.s4 1983009808
      %v1384 = vunpack.c.0.s8 %v1383
      %v1385 = vlaneseq
      %v1386 = vshrl.u32 %v1385, 7
      %v1387 = vsub.s32 %v1384, %v1386
      %v1388 = vrot.slane %v1216, %v1387
      %v1390 = vunpack.c.l.s4 1983009808
      %v1391 = vunpack.c.0.s8 %v1390
      %v1392 = vlaneseq
      %v1393 = vshrl.u32 %v1392, 7
      %v1394 = vsub.s32 %v1391, %v1393
      %v1395 = vrot.slane %v1381, %v1394
      %v1396 = vcombine.high %v1388, %v1388
      %v1397 = vcombine.high %v1217, %v1217
      %v1399 = vunpack.c.l.s4 1983009808
      %v1400 = vunpack.c.0.s8 %v1399
      %v1401 = vlaneseq
      %v1402 = vshrl.u32 %v1401, 7
      %v1403 = vsub.s32 %v1400, %v1402
      %v1404 = vrot.slane %v1217, %v1403
      %v1406 = vunpack.c.l.s4 1983009808
      %v1407 = vunpack.c.0.s8 %v1406
      %v1408 = vlaneseq
      %v1409 = vshrl.u32 %v1408, 7
      %v1410 = vsub.s32 %v1407, %v1409
      %v1411 = vrot.slane %v1397, %v1410
      %v1412 = vcombine.high %v1404, %v1404
      %v1413 = vcombine.high %v1411, %v1411
      %v1414 = vcombine.high %v1218, %v1218
      %v1416 = vunpack.c.l.s4 1983009808
      %v1417 = vunpack.c.0.s8 %v1416
      %v1418 = vlaneseq
      %v1419 = vshrl.u32 %v1418, 7
      %v1420 = vsub.s32 %v1417, %v1419
      %v1421 = vrot.slane %v1218, %v1420
      %v1423 = vunpack.c.l.s4 1983009808
      %v1424 = vunpack.c.0.s8 %v1423
      %v1425 = vlaneseq
      %v1426 = vshrl.u32 %v1425, 7
      %v1427 = vsub.s32 %v1424, %v1426
      %v1428 = vrot.slane %v1414, %v1427
      %v1429 = vcombine.high %v1421, %v1421
      %v1430 = vcombine.high %v1219, %v1219
      %v1432 = vunpack.c.l.s4 1983009808
      %v1433 = vunpack.c.0.s8 %v1432
      %v1434 = vlaneseq
      %v1435 = vshrl.u32 %v1434, 7
      %v1436 = vsub.s32 %v1433, %v1435
      %v1437 = vrot.slane %v1219, %v1436
      %v1439 = vunpack.c.l.s4 1983009808
      %v1440 = vunpack.c.0.s8 %v1439
      %v1441 = vlaneseq
      %v1442 = vshrl.u32 %v1441, 7
      %v1443 = vsub.s32 %v1440, %v1442
      %v1444 = vrot.slane %v1430, %v1443
      %v1445 = vcombine.high %v1437, %v1437
      %v1446 = vcombine.high %v1444, %v1444
      %v1447 = vcombine.high %v1220, %v1220
      %v1449 = vunpack.c.l.s4 1983009808
      %v1450 = vunpack.c.0.s8 %v1449
      %v1451 = vlaneseq
      %v1452 = vshrl.u32 %v1451, 7
      %v1453 = vsub.s32 %v1450, %v1452
      %v1454 = vrot.slane %v1220, %v1453
      %v1456 = vunpack.c.l.s4 1983009808
      %v1457 = vunpack.c.0.s8 %v1456
      %v1458 = vlaneseq
      %v1459 = vshrl.u32 %v1458, 7
      %v1460 = vsub.s32 %v1457, %v1459
      %v1461 = vrot.slane %v1447, %v1460
      %v1462 = vcombine.high %v1454, %v1454
      %v1463 = vcombine.high %v1221, %v1221
      %v1465 = vunpack.c.l.s4 1983009808
      %v1466 = vunpack.c.0.s8 %v1465
      %v1467 = vlaneseq
      %v1468 = vshrl.u32 %v1467, 7
      %v1469 = vsub.s32 %v1466, %v1468
      %v1470 = vrot.slane %v1221, %v1469
      %v1472 = vunpack.c.l.s4 1983009808
      %v1473 = vunpack.c.0.s8 %v1472
      %v1474 = vlaneseq
      %v1475 = vshrl.u32 %v1474, 7
      %v1476 = vsub.s32 %v1473, %v1475
      %v1477 = vrot.slane %v1463, %v1476
      %v1478 = vcombine.high %v1470, %v1470
      %v1479 = vcombine.high %v1477, %v1477
      %v1480 = vcombine.high %v1222, %v1222
      %v1482 = vunpack.c.l.s4 1983009808
      %v1483 = vunpack.c.0.s8 %v1482
      %v1484 = vlaneseq
      %v1485 = vshrl.u32 %v1484, 7
      %v1486 = vsub.s32 %v1483, %v1485
      %v1487 = vrot.slane %v1222, %v1486
      %v1489 = vunpack.c.l.s4 1983009808
      %v1490 = vunpack.c.0.s8 %v1489
      %v1491 = vlaneseq
      %v1492 = vshrl.u32 %v1491, 7
      %v1493 = vsub.s32 %v1490, %v1492
      %v1494 = vrot.slane %v1480, %v1493
      %v1495 = vcombine.high %v1487, %v1487
      %v1496 = vcombine.high %v1223, %v1223
      %v1498 = vunpack.c.l.s4 1983009808
      %v1499 = vunpack.c.0.s8 %v1498
      %v1500 = vlaneseq
      %v1501 = vshrl.u32 %v1500, 7
      %v1502 = vsub.s32 %v1499, %v1501
      %v1503 = vrot.slane %v1223, %v1502
      %v1505 = vunpack.c.l.s4 1983009808
      %v1506 = vunpack.c.0.s8 %v1505
      %v1507 = vlaneseq
      %v1508 = vshrl.u32 %v1507, 7
      %v1509 = vsub.s32 %v1506, %v1508
      %v1510 = vrot.slane %v1496, %v1509
      %v1511 = vcombine.high %v1503, %v1503
      %v1512 = vcombine.high %v1510, %v1510
      %v1513 = vcombine.high %v1224, %v1224
      %v1515 = vunpack.c.l.s4 1983009808
      %v1516 = vunpack.c.0.s8 %v1515
      %v1517 = vlaneseq
      %v1518 = vshrl.u32 %v1517, 7
      %v1519 = vsub.s32 %v1516, %v1518
      %v1520 = vrot.slane %v1224, %v1519
      %v1522 = vunpack.c.l.s4 1983009808
      %v1523 = vunpack.c.0.s8 %v1522
      %v1524 = vlaneseq
      %v1525 = vshrl.u32 %v1524, 7
      %v1526 = vsub.s32 %v1523, %v1525
      %v1527 = vrot.slane %v1513, %v1526
      %v1528 = vcombine.high %v1520, %v1520
      %v1529 = vcombine.high %v1225, %v1225
      %v1531 = vunpack.c.l.s4 1983009808
      %v1532 = vunpack.c.0.s8 %v1531
      %v1533 = vlaneseq
      %v1534 = vshrl.u32 %v1533, 7
      %v1535 = vsub.s32 %v1532, %v1534
      %v1536 = vrot.slane %v1225, %v1535
      %v1538 = vunpack.c.l.s4 1983009808
      %v1539 = vunpack.c.0.s8 %v1538
      %v1540 = vlaneseq
      %v1541 = vshrl.u32 %v1540, 7
      %v1542 = vsub.s32 %v1539, %v1541
      %v1543 = vrot.slane %v1529, %v1542
      %v1544 = vcombine.high %v1536, %v1536
      %v1545 = vcombine.high %v1543, %v1543
      %v1546 = vcombine.high %v1226, %v1226
      %v1548 = vunpack.c.l.s4 1983009808
      %v1549 = vunpack.c.0.s8 %v1548
      %v1550 = vlaneseq
      %v1551 = vshrl.u32 %v1550, 7
      %v1552 = vsub.s32 %v1549, %v1551
      %v1553 = vrot.slane %v1226, %v1552
      %v1555 = vunpack.c.l.s4 1983009808
      %v1556 = vunpack.c.0.s8 %v1555
      %v1557 = vlaneseq
      %v1558 = vshrl.u32 %v1557, 7
      %v1559 = vsub.s32 %v1556, %v1558
      %v1560 = vrot.slane %v1546, %v1559
      %v1561 = vcombine.high %v1553, %v1553
      %v1562 = vcombine.high %v1227, %v1227
      %v1564 = vunpack.c.l.s4 1983009808
      %v1565 = vunpack.c.0.s8 %v1564
      %v1566 = vlaneseq
      %v1567 = vshrl.u32 %v1566, 7
      %v1568 = vsub.s32 %v1565, %v1567
      %v1569 = vrot.slane %v1227, %v1568
      %v1571 = vunpack.c.l.s4 1983009808
      %v1572 = vunpack.c.0.s8 %v1571
      %v1573 = vlaneseq
      %v1574 = vshrl.u32 %v1573, 7
      %v1575 = vsub.s32 %v1572, %v1574
      %v1576 = vrot.slane %v1562, %v1575
      %v1577 = vcombine.high %v1569, %v1569
      %v1578 = vcombine.high %v1576, %v1576
      %v1579 = vcombine.high %v1228, %v1228
      %v1581 = vunpack.c.l.s4 1983009808
      %v1582 = vunpack.c.0.s8 %v1581
      %v1583 = vlaneseq
      %v1584 = vshrl.u32 %v1583, 7
      %v1585 = vsub.s32 %v1582, %v1584
      %v1586 = vrot.slane %v1228, %v1585
      %v1588 = vunpack.c.l.s4 1983009808
      %v1589 = vunpack.c.0.s8 %v1588
      %v1590 = vlaneseq
      %v1591 = vshrl.u32 %v1590, 7
      %v1592 = vsub.s32 %v1589, %v1591
      %v1593 = vrot.slane %v1579, %v1592
      %v1594 = vcombine.high %v1586, %v1586
      %v1595 = vcombine.high %v1229, %v1229
      %v1597 = vunpack.c.l.s4 1983009808
      %v1598 = vunpack.c.0.s8 %v1597
      %v1599 = vlaneseq
      %v1600 = vshrl.u32 %v1599, 7
      %v1601 = vsub.s32 %v1598, %v1600
      %v1602 = vrot.slane %v1229, %v1601
      %v1604 = vunpack.c.l.s4 1983009808
      %v1605 = vunpack.c.0.s8 %v1604
      %v1606 = vlaneseq
      %v1607 = vshrl.u32 %v1606, 7
      %v1608 = vsub.s32 %v1605, %v1607
      %v1609 = vrot.slane %v1595, %v1608
      %v1610 = vcombine.high %v1602, %v1602
      %v1611 = vcombine.high %v1609, %v1609
      %v1612 = vcombine.high %v1230, %v1230
      %v1614 = vunpack.c.l.s4 1983009808
      %v1615 = vunpack.c.0.s8 %v1614
      %v1616 = vlaneseq
      %v1617 = vshrl.u32 %v1616, 7
      %v1618 = vsub.s32 %v1615, %v1617
      %v1619 = vrot.slane %v1230, %v1618
      %v1621 = vunpack.c.l.s4 1983009808
      %v1622 = vunpack.c.0.s8 %v1621
      %v1623 = vlaneseq
      %v1624 = vshrl.u32 %v1623, 7
      %v1625 = vsub.s32 %v1622, %v1624
      %v1626 = vrot.slane %v1612, %v1625
      %v1627 = vcombine.high %v1619, %v1619
      %v1628 = vcombine.high %v1231, %v1231
      %v1630 = vunpack.c.l.s4 1983009808
      %v1631 = vunpack.c.0.s8 %v1630
      %v1632 = vlaneseq
      %v1633 = vshrl.u32 %v1632, 7
      %v1634 = vsub.s32 %v1631, %v1633
      %v1635 = vrot.slane %v1231, %v1634
      %v1637 = vunpack.c.l.s4 1983009808
      %v1638 = vunpack.c.0.s8 %v1637
      %v1639 = vlaneseq
      %v1640 = vshrl.u32 %v1639, 7
      %v1641 = vsub.s32 %v1638, %v1640
      %v1642 = vrot.slane %v1628, %v1641
      %v1643 = vcombine.high %v1635, %v1635
      %v1644 = vcombine.high %v1642, %v1642
      %v1645 = vcombine.high %v1232, %v1232
      %v1647 = vunpack.c.l.s4 1983009808
      %v1648 = vunpack.c.0.s8 %v1647
      %v1649 = vlaneseq
      %v1650 = vshrl.u32 %v1649, 7
      %v1651 = vsub.s32 %v1648, %v1650
      %v1652 = vrot.slane %v1232, %v1651
      %v1654 = vunpack.c.l.s4 1983009808
      %v1655 = vunpack.c.0.s8 %v1654
      %v1656 = vlaneseq
      %v1657 = vshrl.u32 %v1656, 7
      %v1658 = vsub.s32 %v1655, %v1657
      %v1659 = vrot.slane %v1645, %v1658
      %v1660 = vcombine.high %v1652, %v1652
      %v1661 = vcombine.high %v1233, %v1233
      %v1663 = vunpack.c.l.s4 1983009808
      %v1664 = vunpack.c.0.s8 %v1663
      %v1665 = vlaneseq
      %v1666 = vshrl.u32 %v1665, 7
      %v1667 = vsub.s32 %v1664, %v1666
      %v1668 = vrot.slane %v1233, %v1667
      %v1670 = vunpack.c.l.s4 1983009808
      %v1671 = vunpack.c.0.s8 %v1670
      %v1672 = vlaneseq
      %v1673 = vshrl.u32 %v1672, 7
      %v1674 = vsub.s32 %v1671, %v1673
      %v1675 = vrot.slane %v1661, %v1674
      %v1676 = vcombine.high %v1668, %v1668
      %v1677 = vcombine.high %v1675, %v1675
      %v1678 = vcombine.high %v1234, %v1234
      %v1680 = vunpack.c.l.s4 1983009808
      %v1681 = vunpack.c.0.s8 %v1680
      %v1682 = vlaneseq
      %v1683 = vshrl.u32 %v1682, 7
      %v1684 = vsub.s32 %v1681, %v1683
      %v1685 = vrot.slane %v1234, %v1684
      %v1687 = vunpack.c.l.s4 1983009808
      %v1688 = vunpack.c.0.s8 %v1687
      %v1689 = vlaneseq
      %v1690 = vshrl.u32 %v1689, 7
      %v1691 = vsub.s32 %v1688, %v1690
      %v1692 = vrot.slane %v1678, %v1691
      %v1693 = vcombine.high %v1685, %v1685
      %v1694 = vcombine.high %v1235, %v1235
      %v1696 = vunpack.c.l.s4 1983009808
      %v1697 = vunpack.c.0.s8 %v1696
      %v1698 = vlaneseq
      %v1699 = vshrl.u32 %v1698, 7
      %v1700 = vsub.s32 %v1697, %v1699
      %v1701 = vrot.slane %v1235, %v1700
      %v1703 = vunpack.c.l.s4 1983009808
      %v1704 = vunpack.c.0.s8 %v1703
      %v1705 = vlaneseq
      %v1706 = vshrl.u32 %v1705, 7
      %v1707 = vsub.s32 %v1704, %v1706
      %v1708 = vrot.slane %v1694, %v1707
      %v1709 = vcombine.high %v1701, %v1701
      %v1710 = vcombine.high %v1708, %v1708
      %v1711 = vcombine.high %v1236, %v1236
      %v1713 = vunpack.c.l.s4 1983009808
      %v1714 = vunpack.c.0.s8 %v1713
      %v1715 = vlaneseq
      %v1716 = vshrl.u32 %v1715, 7
      %v1717 = vsub.s32 %v1714, %v1716
      %v1718 = vrot.slane %v1236, %v1717
      %v1720 = vunpack.c.l.s4 1983009808
      %v1721 = vunpack.c.0.s8 %v1720
      %v1722 = vlaneseq
      %v1723 = vshrl.u32 %v1722, 7
      %v1724 = vsub.s32 %v1721, %v1723
      %v1725 = vrot.slane %v1711, %v1724
      %v1726 = vcombine.high %v1718, %v1718
      %v1727 = vld [vmem:[%s1] sm:$0xff]
      %v1728 = vld [vmem:[%s1 + $0x8] sm:$0xff]
      %v1729 = vld [vmem:[%s1 + $0x10] sm:$0xff]
      %v1730 = vld [vmem:[%s1 + $0x18] sm:$0x7]
      %v1731 = vld [vmem:[%s2] sm:$0x1]
      %v1733 = vlaneseq
      %v1734 = vshrl.u32 %v1733, 7
      %v1735 = vsub.s32 0, %v1734
      %v1736 = vrot.slane %v1731, %v1735
      %v1738 = vcombine.low %v1272, %v1280
      %v1739 = vcombine.low %v1279, %v1281
      %v1741 = vunpack.c.l.s4 1983009808
      %v1742 = vunpack.c.0.s8 %v1741
      %v1743 = vlaneseq
      %v1744 = vshrl.u32 %v1743, 7
      %v1745 = vsub.s32 %v1742, %v1744
      %v1746 = vrot.slane %v1738, %v1745
      %v1748 = vunpack.c.l.s4 1983009808
      %v1749 = vunpack.c.0.s8 %v1748
      %v1750 = vlaneseq
      %v1751 = vshrl.u32 %v1750, 7
      %v1752 = vsub.s32 %v1749, %v1751
      %v1753 = vrot.slane %v1739, %v1752
      %v1754 = vcombine.low %v1746, %v1753
      %v1755 = vcombine.low %v1289, %v1297
      %v1756 = vcombine.low %v1296, %v1305
      %v1758 = vunpack.c.l.s4 1983009808
      %v1759 = vunpack.c.0.s8 %v1758
      %v1760 = vlaneseq
      %v1761 = vshrl.u32 %v1760, 7
      %v1762 = vsub.s32 %v1759, %v1761
      %v1763 = vrot.slane %v1755, %v1762
      %v1765 = vunpack.c.l.s4 1983009808
      %v1766 = vunpack.c.0.s8 %v1765
      %v1767 = vlaneseq
      %v1768 = vshrl.u32 %v1767, 7
      %v1769 = vsub.s32 %v1766, %v1768
      %v1770 = vrot.slane %v1756, %v1769
      %v1771 = vcombine.low %v1763, %v1770
      %v1772 = vcombine.low %v1313, %v1312
      %v1773 = vcombine.low %v1314, %v1322
      %v1775 = vunpack.c.l.s4 1983009808
      %v1776 = vunpack.c.0.s8 %v1775
      %v1777 = vlaneseq
      %v1778 = vshrl.u32 %v1777, 7
      %v1779 = vsub.s32 %v1776, %v1778
      %v1780 = vrot.slane %v1772, %v1779
      %v1782 = vunpack.c.l.s4 1983009808
      %v1783 = vunpack.c.0.s8 %v1782
      %v1784 = vlaneseq
      %v1785 = vshrl.u32 %v1784, 7
      %v1786 = vsub.s32 %v1783, %v1785
      %v1787 = vrot.slane %v1773, %v1786
      %v1788 = vcombine.low %v1780, %v1787
      %v1789 = vcombine.low %v1330, %v1329
      %v1790 = vcombine.low %v1338, %v1346
      %v1792 = vunpack.c.l.s4 1983009808
      %v1793 = vunpack.c.0.s8 %v1792
      %v1794 = vlaneseq
      %v1795 = vshrl.u32 %v1794, 7
      %v1796 = vsub.s32 %v1793, %v1795
      %v1797 = vrot.slane %v1789, %v1796
      %v1799 = vunpack.c.l.s4 1983009808
      %v1800 = vunpack.c.0.s8 %v1799
      %v1801 = vlaneseq
      %v1802 = vshrl.u32 %v1801, 7
      %v1803 = vsub.s32 %v1800, %v1802
      %v1804 = vrot.slane %v1790, %v1803
      %v1805 = vcombine.low %v1797, %v1804
      %v1806 = vcombine.low %v1345, %v1347
      %v1807 = vcombine.low %v1355, %v1363
      %v1809 = vunpack.c.l.s4 1983009808
      %v1810 = vunpack.c.0.s8 %v1809
      %v1811 = vlaneseq
      %v1812 = vshrl.u32 %v1811, 7
      %v1813 = vsub.s32 %v1810, %v1812
      %v1814 = vrot.slane %v1806, %v1813
      %v1816 = vunpack.c.l.s4 1983009808
      %v1817 = vunpack.c.0.s8 %v1816
      %v1818 = vlaneseq
      %v1819 = vshrl.u32 %v1818, 7
      %v1820 = vsub.s32 %v1817, %v1819
      %v1821 = vrot.slane %v1807, %v1820
      %v1822 = vcombine.low %v1814, %v1821
      %v1823 = vcombine.low %v1362, %v1371
      %v1824 = vcombine.low %v1379, %v1378
      %v1826 = vunpack.c.l.s4 1983009808
      %v1827 = vunpack.c.0.s8 %v1826
      %v1828 = vlaneseq
      %v1829 = vshrl.u32 %v1828, 7
      %v1830 = vsub.s32 %v1827, %v1829
      %v1831 = vrot.slane %v1823, %v1830
      %v1833 = vunpack.c.l.s4 1983009808
      %v1834 = vunpack.c.0.s8 %v1833
      %v1835 = vlaneseq
      %v1836 = vshrl.u32 %v1835, 7
      %v1837 = vsub.s32 %v1834, %v1836
      %v1838 = vrot.slane %v1824, %v1837
      %v1839 = vcombine.low %v1831, %v1838
      %v1840 = vcombine.low %v1380, %v1388
      %v1841 = vcombine.low %v1396, %v1395
      %v1843 = vunpack.c.l.s4 1983009808
      %v1844 = vunpack.c.0.s8 %v1843
      %v1845 = vlaneseq
      %v1846 = vshrl.u32 %v1845, 7
      %v1847 = vsub.s32 %v1844, %v1846
      %v1848 = vrot.slane %v1840, %v1847
      %v1850 = vunpack.c.l.s4 1983009808
      %v1851 = vunpack.c.0.s8 %v1850
      %v1852 = vlaneseq
      %v1853 = vshrl.u32 %v1852, 7
      %v1854 = vsub.s32 %v1851, %v1853
      %v1855 = vrot.slane %v1841, %v1854
      %v1856 = vcombine.low %v1848, %v1855
      %v1857 = vcombine.low %v1404, %v1412
      %v1858 = vcombine.low %v1411, %v1413
      %v1860 = vunpack.c.l.s4 1983009808
      %v1861 = vunpack.c.0.s8 %v1860
      %v1862 = vlaneseq
      %v1863 = vshrl.u32 %v1862, 7
      %v1864 = vsub.s32 %v1861, %v1863
      %v1865 = vrot.slane %v1857, %v1864
      %v1867 = vunpack.c.l.s4 1983009808
      %v1868 = vunpack.c.0.s8 %v1867
      %v1869 = vlaneseq
      %v1870 = vshrl.u32 %v1869, 7
      %v1871 = vsub.s32 %v1868, %v1870
      %v1872 = vrot.slane %v1858, %v1871
      %v1873 = vcombine.low %v1865, %v1872
      %v1874 = vcombine.low %v1421, %v1429
      %v1875 = vcombine.low %v1428, %v1437
      %v1877 = vunpack.c.l.s4 1983009808
      %v1878 = vunpack.c.0.s8 %v1877
      %v1879 = vlaneseq
      %v1880 = vshrl.u32 %v1879, 7
      %v1881 = vsub.s32 %v1878, %v1880
      %v1882 = vrot.slane %v1874, %v1881
      %v1884 = vunpack.c.l.s4 1983009808
      %v1885 = vunpack.c.0.s8 %v1884
      %v1886 = vlaneseq
      %v1887 = vshrl.u32 %v1886, 7
      %v1888 = vsub.s32 %v1885, %v1887
      %v1889 = vrot.slane %v1875, %v1888
      %v1890 = vcombine.low %v1882, %v1889
      %v1891 = vcombine.low %v1445, %v1444
      %v1892 = vcombine.low %v1446, %v1454
      %v1894 = vunpack.c.l.s4 1983009808
      %v1895 = vunpack.c.0.s8 %v1894
      %v1896 = vlaneseq
      %v1897 = vshrl.u32 %v1896, 7
      %v1898 = vsub.s32 %v1895, %v1897
      %v1899 = vrot.slane %v1891, %v1898
      %v1901 = vunpack.c.l.s4 1983009808
      %v1902 = vunpack.c.0.s8 %v1901
      %v1903 = vlaneseq
      %v1904 = vshrl.u32 %v1903, 7
      %v1905 = vsub.s32 %v1902, %v1904
      %v1906 = vrot.slane %v1892, %v1905
      %v1907 = vcombine.low %v1899, %v1906
      %v1908 = vcombine.low %v1462, %v1461
      %v1909 = vcombine.low %v1470, %v1478
      %v1911 = vunpack.c.l.s4 1983009808
      %v1912 = vunpack.c.0.s8 %v1911
      %v1913 = vlaneseq
      %v1914 = vshrl.u32 %v1913, 7
      %v1915 = vsub.s32 %v1912, %v1914
      %v1916 = vrot.slane %v1908, %v1915
      %v1918 = vunpack.c.l.s4 1983009808
      %v1919 = vunpack.c.0.s8 %v1918
      %v1920 = vlaneseq
      %v1921 = vshrl.u32 %v1920, 7
      %v1922 = vsub.s32 %v1919, %v1921
      %v1923 = vrot.slane %v1909, %v1922
      %v1924 = vcombine.low %v1916, %v1923
      %v1925 = vcombine.low %v1477, %v1479
      %v1926 = vcombine.low %v1487, %v1495
      %v1928 = vunpack.c.l.s4 1983009808
      %v1929 = vunpack.c.0.s8 %v1928
      %v1930 = vlaneseq
      %v1931 = vshrl.u32 %v1930, 7
      %v1932 = vsub.s32 %v1929, %v1931
      %v1933 = vrot.slane %v1925, %v1932
      %v1935 = vunpack.c.l.s4 1983009808
      %v1936 = vunpack.c.0.s8 %v1935
      %v1937 = vlaneseq
      %v1938 = vshrl.u32 %v1937, 7
      %v1939 = vsub.s32 %v1936, %v1938
      %v1940 = vrot.slane %v1926, %v1939
      %v1941 = vcombine.low %v1933, %v1940
      %v1942 = vcombine.low %v1494, %v1503
      %v1943 = vcombine.low %v1511, %v1510
      %v1945 = vunpack.c.l.s4 1983009808
      %v1946 = vunpack.c.0.s8 %v1945
      %v1947 = vlaneseq
      %v1948 = vshrl.u32 %v1947, 7
      %v1949 = vsub.s32 %v1946, %v1948
      %v1950 = vrot.slane %v1942, %v1949
      %v1952 = vunpack.c.l.s4 1983009808
      %v1953 = vunpack.c.0.s8 %v1952
      %v1954 = vlaneseq
      %v1955 = vshrl.u32 %v1954, 7
      %v1956 = vsub.s32 %v1953, %v1955
      %v1957 = vrot.slane %v1943, %v1956
      %v1958 = vcombine.low %v1950, %v1957
      %v1959 = vcombine.low %v1512, %v1520
      %v1960 = vcombine.low %v1528, %v1527
      %v1962 = vunpack.c.l.s4 1983009808
      %v1963 = vunpack.c.0.s8 %v1962
      %v1964 = vlaneseq
      %v1965 = vshrl.u32 %v1964, 7
      %v1966 = vsub.s32 %v1963, %v1965
      %v1967 = vrot.slane %v1959, %v1966
      %v1969 = vunpack.c.l.s4 1983009808
      %v1970 = vunpack.c.0.s8 %v1969
      %v1971 = vlaneseq
      %v1972 = vshrl.u32 %v1971, 7
      %v1973 = vsub.s32 %v1970, %v1972
      %v1974 = vrot.slane %v1960, %v1973
      %v1975 = vcombine.low %v1967, %v1974
      %v1976 = vcombine.low %v1536, %v1544
      %v1977 = vcombine.low %v1543, %v1545
      %v1979 = vunpack.c.l.s4 1983009808
      %v1980 = vunpack.c.0.s8 %v1979
      %v1981 = vlaneseq
      %v1982 = vshrl.u32 %v1981, 7
      %v1983 = vsub.s32 %v1980, %v1982
      %v1984 = vrot.slane %v1976, %v1983
      %v1986 = vunpack.c.l.s4 1983009808
      %v1987 = vunpack.c.0.s8 %v1986
      %v1988 = vlaneseq
      %v1989 = vshrl.u32 %v1988, 7
      %v1990 = vsub.s32 %v1987, %v1989
      %v1991 = vrot.slane %v1977, %v1990
      %v1992 = vcombine.low %v1984, %v1991
      %v1993 = vcombine.low %v1553, %v1561
      %v1994 = vcombine.low %v1560, %v1569
      %v1996 = vunpack.c.l.s4 1983009808
      %v1997 = vunpack.c.0.s8 %v1996
      %v1998 = vlaneseq
      %v1999 = vshrl.u32 %v1998, 7
      %v2000 = vsub.s32 %v1997, %v1999
      %v2001 = vrot.slane %v1993, %v2000
      %v2003 = vunpack.c.l.s4 1983009808
      %v2004 = vunpack.c.0.s8 %v2003
      %v2005 = vlaneseq
      %v2006 = vshrl.u32 %v2005, 7
      %v2007 = vsub.s32 %v2004, %v2006
      %v2008 = vrot.slane %v1994, %v2007
      %v2009 = vcombine.low %v2001, %v2008
      %v2010 = vcombine.low %v1577, %v1576
      %v2011 = vcombine.low %v1578, %v1586
      %v2013 = vunpack.c.l.s4 1983009808
      %v2014 = vunpack.c.0.s8 %v2013
      %v2015 = vlaneseq
      %v2016 = vshrl.u32 %v2015, 7
      %v2017 = vsub.s32 %v2014, %v2016
      %v2018 = vrot.slane %v2010, %v2017
      %v2020 = vunpack.c.l.s4 1983009808
      %v2021 = vunpack.c.0.s8 %v2020
      %v2022 = vlaneseq
      %v2023 = vshrl.u32 %v2022, 7
      %v2024 = vsub.s32 %v2021, %v2023
      %v2025 = vrot.slane %v2011, %v2024
      %v2026 = vcombine.low %v2018, %v2025
      %v2027 = vcombine.low %v1594, %v1593
      %v2028 = vcombine.low %v1602, %v1610
      %v2030 = vunpack.c.l.s4 1983009808
      %v2031 = vunpack.c.0.s8 %v2030
      %v2032 = vlaneseq
      %v2033 = vshrl.u32 %v2032, 7
      %v2034 = vsub.s32 %v2031, %v2033
      %v2035 = vrot.slane %v2027, %v2034
      %v2037 = vunpack.c.l.s4 1983009808
      %v2038 = vunpack.c.0.s8 %v2037
      %v2039 = vlaneseq
      %v2040 = vshrl.u32 %v2039, 7
      %v2041 = vsub.s32 %v2038, %v2040
      %v2042 = vrot.slane %v2028, %v2041
      %v2043 = vcombine.low %v2035, %v2042
      %v2044 = vcombine.low %v1609, %v1611
      %v2045 = vcombine.low %v1619, %v1627
      %v2047 = vunpack.c.l.s4 1983009808
      %v2048 = vunpack.c.0.s8 %v2047
      %v2049 = vlaneseq
      %v2050 = vshrl.u32 %v2049, 7
      %v2051 = vsub.s32 %v2048, %v2050
      %v2052 = vrot.slane %v2044, %v2051
      %v2054 = vunpack.c.l.s4 1983009808
      %v2055 = vunpack.c.0.s8 %v2054
      %v2056 = vlaneseq
      %v2057 = vshrl.u32 %v2056, 7
      %v2058 = vsub.s32 %v2055, %v2057
      %v2059 = vrot.slane %v2045, %v2058
      %v2060 = vcombine.low %v2052, %v2059
      %v2061 = vcombine.low %v1626, %v1635
      %v2062 = vcombine.low %v1643, %v1642
      %v2064 = vunpack.c.l.s4 1983009808
      %v2065 = vunpack.c.0.s8 %v2064
      %v2066 = vlaneseq
      %v2067 = vshrl.u32 %v2066, 7
      %v2068 = vsub.s32 %v2065, %v2067
      %v2069 = vrot.slane %v2061, %v2068
      %v2071 = vunpack.c.l.s4 1983009808
      %v2072 = vunpack.c.0.s8 %v2071
      %v2073 = vlaneseq
      %v2074 = vshrl.u32 %v2073, 7
      %v2075 = vsub.s32 %v2072, %v2074
      %v2076 = vrot.slane %v2062, %v2075
      %v2077 = vcombine.low %v2069, %v2076
      %v2078 = vcombine.low %v1644, %v1652
      %v2079 = vcombine.low %v1660, %v1659
      %v2081 = vunpack.c.l.s4 1983009808
      %v2082 = vunpack.c.0.s8 %v2081
      %v2083 = vlaneseq
      %v2084 = vshrl.u32 %v2083, 7
      %v2085 = vsub.s32 %v2082, %v2084
      %v2086 = vrot.slane %v2078, %v2085
      %v2088 = vunpack.c.l.s4 1983009808
      %v2089 = vunpack.c.0.s8 %v2088
      %v2090 = vlaneseq
      %v2091 = vshrl.u32 %v2090, 7
      %v2092 = vsub.s32 %v2089, %v2091
      %v2093 = vrot.slane %v2079, %v2092
      %v2094 = vcombine.low %v2086, %v2093
      %v2095 = vcombine.low %v1668, %v1676
      %v2096 = vcombine.low %v1675, %v1677
      %v2098 = vunpack.c.l.s4 1983009808
      %v2099 = vunpack.c.0.s8 %v2098
      %v2100 = vlaneseq
      %v2101 = vshrl.u32 %v2100, 7
      %v2102 = vsub.s32 %v2099, %v2101
      %v2103 = vrot.slane %v2095, %v2102
      %v2105 = vunpack.c.l.s4 1983009808
      %v2106 = vunpack.c.0.s8 %v2105
      %v2107 = vlaneseq
      %v2108 = vshrl.u32 %v2107, 7
      %v2109 = vsub.s32 %v2106, %v2108
      %v2110 = vrot.slane %v2096, %v2109
      %v2111 = vcombine.low %v2103, %v2110
      %v2112 = vcombine.low %v1685, %v1693
      %v2113 = vcombine.low %v1692, %v1701
      %v2115 = vunpack.c.l.s4 1983009808
      %v2116 = vunpack.c.0.s8 %v2115
      %v2117 = vlaneseq
      %v2118 = vshrl.u32 %v2117, 7
      %v2119 = vsub.s32 %v2116, %v2118
      %v2120 = vrot.slane %v2112, %v2119
      %v2122 = vunpack.c.l.s4 1983009808
      %v2123 = vunpack.c.0.s8 %v2122
      %v2124 = vlaneseq
      %v2125 = vshrl.u32 %v2124, 7
      %v2126 = vsub.s32 %v2123, %v2125
      %v2127 = vrot.slane %v2113, %v2126
      %v2128 = vcombine.low %v2120, %v2127
      %v2129 = vcombine.low %v1709, %v1708
      %v2130 = vcombine.low %v1710, %v1718
      %v2132 = vunpack.c.l.s4 1983009808
      %v2133 = vunpack.c.0.s8 %v2132
      %v2134 = vlaneseq
      %v2135 = vshrl.u32 %v2134, 7
      %v2136 = vsub.s32 %v2133, %v2135
      %v2137 = vrot.slane %v2129, %v2136
      %v2139 = vunpack.c.l.s4 1983009808
      %v2140 = vunpack.c.0.s8 %v2139
      %v2141 = vlaneseq
      %v2142 = vshrl.u32 %v2141, 7
      %v2143 = vsub.s32 %v2140, %v2142
      %v2144 = vrot.slane %v2130, %v2143
      %v2145 = vcombine.low %v2137, %v2144
      %v2146 = vcombine.low %v1726, %v1725
      %v2148 = vunpack.c.l.s4 1983009808
      %v2149 = vunpack.c.0.s8 %v2148
      %v2150 = vlaneseq
      %v2151 = vshrl.u32 %v2150, 7
      %v2152 = vsub.s32 %v2149, %v2151
      %v2153 = vrot.slane %v2146, %v2152
      %vm2154 = vcmask 220160
      %v2155 = vsel %vm2154, %v1754, 0
      %v2157 = vsel %vm2154, %v1771, 0
      %v2159 = vsel %vm2154, %v1788, 0
      %v2161 = vsel %vm2154, %v1805, 0
      %v2163 = vsel %vm2154, %v1822, 0
      %v2165 = vsel %vm2154, %v1839, 0
      %v2167 = vsel %vm2154, %v1856, 0
      %v2169 = vsel %vm2154, %v1873, 0
      %v2171 = vsel %vm2154, %v1890, 0
      %v2173 = vsel %vm2154, %v1907, 0
      %v2175 = vsel %vm2154, %v1924, 0
      %v2177 = vsel %vm2154, %v1941, 0
      %v2179 = vsel %vm2154, %v1958, 0
      %v2181 = vsel %vm2154, %v1975, 0
      %v2183 = vsel %vm2154, %v1992, 0
      %v2185 = vsel %vm2154, %v2009, 0
      %v2187 = vsel %vm2154, %v2026, 0
      %v2189 = vsel %vm2154, %v2043, 0
      %v2191 = vsel %vm2154, %v2060, 0
      %v2193 = vsel %vm2154, %v2077, 0
      %v2195 = vsel %vm2154, %v2094, 0
      %v2197 = vsel %vm2154, %v2111, 0
      %v2199 = vsel %vm2154, %v2128, 0
      %v2201 = vsel %vm2154, %v2145, 0
      %v2203 = vsel %vm2154, %v2153, 0
      %vm2205 = vcmask 1042432
      %v2207 = vsel %vm2205, %v1730, 0
      %2209 = vmatprep.subr.mxu0 0.0
      %2210 = vmatpush1.msra.mxu0 %v1727
      %2211 = vmatprep.subr.mxu0 0.0
      %2212 = vmatpush1.msra.mxu0 %v1728
      %2213 = vmatprep.subr.mxu0 0.0
      %2214 = vmatpush1.msra.mxu0 %v1729
      %2215 = vmatprep.subr.mxu0 0.0
      %2216 = vmatpush1.msra.mxu0 %v2207
      %2217 = vmatprep.subr.mxu0 0.0
      %2218 = vmatpush1.msra.mxu0 0.0
      %2219 = vmatprep.subr.mxu0 0.0
      %2220 = vmatpush1.msra.mxu0 0.0
      %2221 = vmatprep.subr.mxu0 0.0
      %2222 = vmatpush1.msra.mxu0 0.0
      %2223 = vmatprep.subr.mxu0 0.0
      %2224 = vmatpush1.msra.mxu0 0.0
      %2225 = vmatprep.subr.mxu0 0.0
      %2226 = vmatpush1.msra.mxu0 0.0
      %2227 = vmatprep.subr.mxu0 0.0
      %2228 = vmatpush1.msra.mxu0 0.0
      %2229 = vmatprep.subr.mxu0 0.0
      %2230 = vmatpush1.msra.mxu0 0.0
      %2231 = vmatprep.subr.mxu0 0.0
      %2232 = vmatpush1.msra.mxu0 0.0
      %2233 = vmatprep.subr.mxu0 0.0
      %2234 = vmatpush1.msra.mxu0 0.0
      %2235 = vmatprep.subr.mxu0 0.0
      %2236 = vmatpush1.msra.mxu0 0.0
      %2237 = vmatprep.subr.mxu0 0.0
      %2238 = vmatpush1.msra.mxu0 0.0
      %2239 = vmatprep.subr.mxu0 0.0
      %2240 = vmatpush1.msra.mxu0 0.0
      %2241 = vmatprep.subr.mxu0 0.0
      %2242 = vmatpush1.msra.mxu0 0.0
      %2243 = vmatprep.subr.mxu0 0.0
      %2244 = vmatpush1.msra.mxu0 0.0
      %2245 = vmatprep.subr.mxu0 0.0
      %2246 = vmatpush1.msra.mxu0 0.0
      %2247 = vmatprep.subr.mxu0 0.0
      %2248 = vmatpush1.msra.mxu0 0.0
      %2249 = vmatprep.subr.mxu0 0.0
      %2250 = vmatpush1.msra.mxu0 0.0
      %2251 = vmatprep.subr.mxu0 0.0
      %2252 = vmatpush1.msra.mxu0 0.0
      %2253 = vmatprep.subr.mxu0 0.0
      %2254 = vmatpush1.msra.mxu0 0.0
      %2255 = vmatprep.subr.mxu0 0.0
      %2256 = vmatpush1.msra.mxu0 0.0
      %2257 = vmatprep.subr.mxu0 0.0
      %2258 = vmatpush1.msra.mxu0 0.0
      %2259 = vmatprep.subr.mxu0 0.0
      %2260 = vmatpush1.msra.mxu0 0.0
      %2261 = vmatprep.subr.mxu0 0.0
      %2262 = vmatpush1.msra.mxu0 0.0
      %2263 = vmatprep.subr.mxu0 0.0
      %2264 = vmatpush1.msra.mxu0 0.0
      %2265 = vmatprep.subr.mxu0 0.0
      %2266 = vmatpush1.msra.mxu0 0.0
      %2267 = vmatprep.subr.mxu0 0.0
      %2268 = vmatpush1.msra.mxu0 0.0
      %2269 = vmatprep.subr.mxu0 0.0
      %2270 = vmatpush1.msra.mxu0 0.0
      %2271 = vmatprep.subr.mxu0 0.0
      %2272 = vmatpush1.msra.mxu0 0.0
      %2273 = vmatprep.mubr.f32.mxu0 0.0
      %2274 = vmatmul.mubr.f32.gmra.mrb[0].mxu0 %v2155
      %v2275 = vpop.f32.mrb[0].mxu0
      %v2276 = vadd.f32 %v1736, %v2275
      %v2277 = vpop.f32.mrb[0].mxu0
      %2278 = vmatprep.mubr.f32.mxu0 0.0
      %2279 = vmatmul.mubr.f32.gmra.mrb[0].mxu0 %v2157
      %v2280 = vpop.f32.mrb[0].mxu0
      %v2281 = vadd.f32 %v1736, %v2280
      %v2282 = vpop.f32.mrb[0].mxu0
      %2283 = vmatprep.mubr.f32.mxu0 0.0
      %2284 = vmatmul.mubr.f32.gmra.mrb[0].mxu0 %v2159
      %v2285 = vpop.f32.mrb[0].mxu0
      %v2286 = vadd.f32 %v1736, %v2285
      %v2287 = vpop.f32.mrb[0].mxu0
      %2288 = vmatprep.mubr.f32.mxu0 0.0
      %2289 = vmatmul.mubr.f32.gmra.mrb[0].mxu0 %v2161
      %v2290 = vpop.f32.mrb[0].mxu0
      %v2291 = vadd.f32 %v1736, %v2290
      %v2292 = vpop.f32.mrb[0].mxu0
      %2293 = vmatprep.mubr.f32.mxu0 0.0
      %2294 = vmatmul.mubr.f32.gmra.mrb[0].mxu0 %v2163
      %v2295 = vpop.f32.mrb[0].mxu0
      %v2296 = vadd.f32 %v1736, %v2295
      %v2297 = vpop.f32.mrb[0].mxu0
      %2298 = vmatprep.mubr.f32.mxu0 0.0
      %2299 = vmatmul.mubr.f32.gmra.mrb[0].mxu0 %v2165
      %v2300 = vpop.f32.mrb[0].mxu0
      %v2301 = vadd.f32 %v1736, %v2300
      %v2302 = vpop.f32.mrb[0].mxu0
      %2303 = vmatprep.mubr.f32.mxu0 0.0
      %2304 = vmatmul.mubr.f32.gmra.mrb[0].mxu0 %v2167
      %v2305 = vpop.f32.mrb[0].mxu0
      %v2306 = vadd.f32 %v1736, %v2305
      %v2307 = vpop.f32.mrb[0].mxu0
      %2308 = vmatprep.mubr.f32.mxu0 0.0
      %2309 = vmatmul.mubr.f32.gmra.mrb[0].mxu0 %v2169
      %v2310 = vpop.f32.mrb[0].mxu0
      %v2311 = vadd.f32 %v1736, %v2310
      %v2312 = vpop.f32.mrb[0].mxu0
      %2313 = vmatprep.mubr.f32.mxu0 0.0
      %2314 = vmatmul.mubr.f32.gmra.mrb[0].mxu0 %v2171
      %v2315 = vpop.f32.mrb[0].mxu0
      %v2316 = vadd.f32 %v1736, %v2315
      %v2317 = vpop.f32.mrb[0].mxu0
      %2318 = vmatprep.mubr.f32.mxu0 0.0
      %2319 = vmatmul.mubr.f32.gmra.mrb[0].mxu0 %v2173
      %v2320 = vpop.f32.mrb[0].mxu0
      %v2321 = vadd.f32 %v1736, %v2320
      %v2322 = vpop.f32.mrb[0].mxu0
      %2323 = vmatprep.mubr.f32.mxu0 0.0
      %2324 = vmatmul.mubr.f32.gmra.mrb[0].mxu0 %v2175
      %v2325 = vpop.f32.mrb[0].mxu0
      %v2326 = vadd.f32 %v1736, %v2325
      %v2327 = vpop.f32.mrb[0].mxu0
      %2328 = vmatprep.mubr.f32.mxu0 0.0
      %2329 = vmatmul.mubr.f32.gmra.mrb[0].mxu0 %v2177
      %v2330 = vpop.f32.mrb[0].mxu0
      %v2331 = vadd.f32 %v1736, %v2330
      %v2332 = vpop.f32.mrb[0].mxu0
      %2333 = vmatprep.mubr.f32.mxu0 0.0
      %2334 = vmatmul.mubr.f32.gmra.mrb[0].mxu0 %v2179
      %v2335 = vpop.f32.mrb[0].mxu0
      %v2336 = vadd.f32 %v1736, %v2335
      %v2337 = vpop.f32.mrb[0].mxu0
      %2338 = vmatprep.mubr.f32.mxu0 0.0
      %2339 = vmatmul.mubr.f32.gmra.mrb[0].mxu0 %v2181
      %v2340 = vpop.f32.mrb[0].mxu0
      %v2341 = vadd.f32 %v1736, %v2340
      %v2342 = vpop.f32.mrb[0].mxu0
      %2343 = vmatprep.mubr.f32.mxu0 0.0
      %2344 = vmatmul.mubr.f32.gmra.mrb[0].mxu0 %v2183
      %v2345 = vpop.f32.mrb[0].mxu0
      %v2346 = vadd.f32 %v1736, %v2345
      %v2347 = vpop.f32.mrb[0].mxu0
      %2348 = vmatprep.mubr.f32.mxu0 0.0
      %2349 = vmatmul.mubr.f32.gmra.mrb[0].mxu0 %v2185
      %v2350 = vpop.f32.mrb[0].mxu0
      %v2351 = vadd.f32 %v1736, %v2350
      %v2352 = vpop.f32.mrb[0].mxu0
      %2353 = vmatprep.mubr.f32.mxu0 0.0
      %2354 = vmatmul.mubr.f32.gmra.mrb[0].mxu0 %v2187
      %v2355 = vpop.f32.mrb[0].mxu0
      %v2356 = vadd.f32 %v1736, %v2355
      %v2357 = vpop.f32.mrb[0].mxu0
      %2358 = vmatprep.mubr.f32.mxu0 0.0
      %2359 = vmatmul.mubr.f32.gmra.mrb[0].mxu0 %v2189
      %v2360 = vpop.f32.mrb[0].mxu0
      %v2361 = vadd.f32 %v1736, %v2360
      %v2362 = vpop.f32.mrb[0].mxu0
      %2363 = vmatprep.mubr.f32.mxu0 0.0
      %2364 = vmatmul.mubr.f32.gmra.mrb[0].mxu0 %v2191
      %v2365 = vpop.f32.mrb[0].mxu0
      %v2366 = vadd.f32 %v1736, %v2365
      %v2367 = vpop.f32.mrb[0].mxu0
      %2368 = vmatprep.mubr.f32.mxu0 0.0
      %2369 = vmatmul.mubr.f32.gmra.mrb[0].mxu0 %v2193
      %v2370 = vpop.f32.mrb[0].mxu0
      %v2371 = vadd.f32 %v1736, %v2370
      %v2372 = vpop.f32.mrb[0].mxu0
      %2373 = vmatprep.mubr.f32.mxu0 0.0
      %2374 = vmatmul.mubr.f32.gmra.mrb[0].mxu0 %v2195
      %v2375 = vpop.f32.mrb[0].mxu0
      %v2376 = vadd.f32 %v1736, %v2375
      %v2377 = vpop.f32.mrb[0].mxu0
      %2378 = vmatprep.mubr.f32.mxu0 0.0
      %2379 = vmatmul.mubr.f32.gmra.mrb[0].mxu0 %v2197
      %v2380 = vpop.f32.mrb[0].mxu0
      %v2381 = vadd.f32 %v1736, %v2380
      %v2382 = vpop.f32.mrb[0].mxu0
      %2383 = vmatprep.mubr.f32.mxu0 0.0
      %2384 = vmatmul.mubr.f32.gmra.mrb[0].mxu0 %v2199
      %v2385 = vpop.f32.mrb[0].mxu0
      %v2386 = vadd.f32 %v1736, %v2385
      %v2387 = vpop.f32.mrb[0].mxu0
      %2388 = vmatprep.mubr.f32.mxu0 0.0
      %2389 = vmatmul.mubr.f32.gmra.mrb[0].mxu0 %v2201
      %v2390 = vpop.f32.mrb[0].mxu0
      %v2391 = vadd.f32 %v1736, %v2390
      %v2392 = vpop.f32.mrb[0].mxu0
      %2393 = vmatprep.mubr.f32.mxu0 0.0
      %2394 = vmatmul.mubr.f32.gmra.mrb[0].mxu0 %v2203
      %v2395 = vpop.f32.mrb[0].mxu0
      %v2396 = vadd.f32 %v1736, %v2395
      %v2397 = vpop.f32.mrb[0].mxu0
      %2398 = vdwg.mxu0
      %v2424 = vcombine.high %v2276, %v2276
      %v2426 = vunpack.c.l.s4 1983009808
      %v2427 = vunpack.c.0.s8 %v2426
      %v2428 = vlaneseq
      %v2429 = vshrl.u32 %v2428, 7
      %v2430 = vsub.s32 %v2427, %v2429
      %v2431 = vrot.slane %v2276, %v2430
      %v2433 = vunpack.c.l.s4 1983009808
      %v2434 = vunpack.c.0.s8 %v2433
      %v2435 = vlaneseq
      %v2436 = vshrl.u32 %v2435, 7
      %v2437 = vsub.s32 %v2434, %v2436
      %v2438 = vrot.slane %v2424, %v2437
      %v2439 = vcombine.high %v2431, %v2431
      %v2440 = vcombine.high %v2438, %v2438
      %v2441 = vcombine.high %v2281, %v2281
      %v2443 = vunpack.c.l.s4 1983009808
      %v2444 = vunpack.c.0.s8 %v2443
      %v2445 = vlaneseq
      %v2446 = vshrl.u32 %v2445, 7
      %v2447 = vsub.s32 %v2444, %v2446
      %v2448 = vrot.slane %v2281, %v2447
      %v2450 = vunpack.c.l.s4 1983009808
      %v2451 = vunpack.c.0.s8 %v2450
      %v2452 = vlaneseq
      %v2453 = vshrl.u32 %v2452, 7
      %v2454 = vsub.s32 %v2451, %v2453
      %v2455 = vrot.slane %v2441, %v2454
      %v2456 = vcombine.high %v2448, %v2448
      %v2457 = vcombine.high %v2455, %v2455
      %v2458 = vcombine.high %v2286, %v2286
      %v2460 = vunpack.c.l.s4 1983009808
      %v2461 = vunpack.c.0.s8 %v2460
      %v2462 = vlaneseq
      %v2463 = vshrl.u32 %v2462, 7
      %v2464 = vsub.s32 %v2461, %v2463
      %v2465 = vrot.slane %v2286, %v2464
      %v2467 = vunpack.c.l.s4 1983009808
      %v2468 = vunpack.c.0.s8 %v2467
      %v2469 = vlaneseq
      %v2470 = vshrl.u32 %v2469, 7
      %v2471 = vsub.s32 %v2468, %v2470
      %v2472 = vrot.slane %v2458, %v2471
      %v2473 = vcombine.high %v2465, %v2465
      %v2474 = vcombine.high %v2472, %v2472
      %v2475 = vcombine.high %v2291, %v2291
      %v2477 = vunpack.c.l.s4 1983009808
      %v2478 = vunpack.c.0.s8 %v2477
      %v2479 = vlaneseq
      %v2480 = vshrl.u32 %v2479, 7
      %v2481 = vsub.s32 %v2478, %v2480
      %v2482 = vrot.slane %v2291, %v2481
      %v2484 = vunpack.c.l.s4 1983009808
      %v2485 = vunpack.c.0.s8 %v2484
      %v2486 = vlaneseq
      %v2487 = vshrl.u32 %v2486, 7
      %v2488 = vsub.s32 %v2485, %v2487
      %v2489 = vrot.slane %v2475, %v2488
      %v2490 = vcombine.high %v2482, %v2482
      %v2491 = vcombine.high %v2489, %v2489
      %v2492 = vcombine.high %v2296, %v2296
      %v2494 = vunpack.c.l.s4 1983009808
      %v2495 = vunpack.c.0.s8 %v2494
      %v2496 = vlaneseq
      %v2497 = vshrl.u32 %v2496, 7
      %v2498 = vsub.s32 %v2495, %v2497
      %v2499 = vrot.slane %v2296, %v2498
      %v2501 = vunpack.c.l.s4 1983009808
      %v2502 = vunpack.c.0.s8 %v2501
      %v2503 = vlaneseq
      %v2504 = vshrl.u32 %v2503, 7
      %v2505 = vsub.s32 %v2502, %v2504
      %v2506 = vrot.slane %v2492, %v2505
      %v2507 = vcombine.high %v2499, %v2499
      %v2508 = vcombine.high %v2506, %v2506
      %v2509 = vcombine.high %v2301, %v2301
      %v2511 = vunpack.c.l.s4 1983009808
      %v2512 = vunpack.c.0.s8 %v2511
      %v2513 = vlaneseq
      %v2514 = vshrl.u32 %v2513, 7
      %v2515 = vsub.s32 %v2512, %v2514
      %v2516 = vrot.slane %v2301, %v2515
      %v2518 = vunpack.c.l.s4 1983009808
      %v2519 = vunpack.c.0.s8 %v2518
      %v2520 = vlaneseq
      %v2521 = vshrl.u32 %v2520, 7
      %v2522 = vsub.s32 %v2519, %v2521
      %v2523 = vrot.slane %v2509, %v2522
      %v2524 = vcombine.high %v2516, %v2516
      %v2525 = vcombine.high %v2523, %v2523
      %v2526 = vcombine.high %v2306, %v2306
      %v2528 = vunpack.c.l.s4 1983009808
      %v2529 = vunpack.c.0.s8 %v2528
      %v2530 = vlaneseq
      %v2531 = vshrl.u32 %v2530, 7
      %v2532 = vsub.s32 %v2529, %v2531
      %v2533 = vrot.slane %v2306, %v2532
      %v2535 = vunpack.c.l.s4 1983009808
      %v2536 = vunpack.c.0.s8 %v2535
      %v2537 = vlaneseq
      %v2538 = vshrl.u32 %v2537, 7
      %v2539 = vsub.s32 %v2536, %v2538
      %v2540 = vrot.slane %v2526, %v2539
      %v2541 = vcombine.high %v2533, %v2533
      %v2542 = vcombine.high %v2540, %v2540
      %v2543 = vcombine.high %v2311, %v2311
      %v2545 = vunpack.c.l.s4 1983009808
      %v2546 = vunpack.c.0.s8 %v2545
      %v2547 = vlaneseq
      %v2548 = vshrl.u32 %v2547, 7
      %v2549 = vsub.s32 %v2546, %v2548
      %v2550 = vrot.slane %v2311, %v2549
      %v2552 = vunpack.c.l.s4 1983009808
      %v2553 = vunpack.c.0.s8 %v2552
      %v2554 = vlaneseq
      %v2555 = vshrl.u32 %v2554, 7
      %v2556 = vsub.s32 %v2553, %v2555
      %v2557 = vrot.slane %v2543, %v2556
      %v2558 = vcombine.high %v2550, %v2550
      %v2559 = vcombine.high %v2557, %v2557
      %v2560 = vcombine.high %v2316, %v2316
      %v2562 = vunpack.c.l.s4 1983009808
      %v2563 = vunpack.c.0.s8 %v2562
      %v2564 = vlaneseq
      %v2565 = vshrl.u32 %v2564, 7
      %v2566 = vsub.s32 %v2563, %v2565
      %v2567 = vrot.slane %v2316, %v2566
      %v2569 = vunpack.c.l.s4 1983009808
      %v2570 = vunpack.c.0.s8 %v2569
      %v2571 = vlaneseq
      %v2572 = vshrl.u32 %v2571, 7
      %v2573 = vsub.s32 %v2570, %v2572
      %v2574 = vrot.slane %v2560, %v2573
      %v2575 = vcombine.high %v2567, %v2567
      %v2576 = vcombine.high %v2574, %v2574
      %v2577 = vcombine.high %v2321, %v2321
      %v2579 = vunpack.c.l.s4 1983009808
      %v2580 = vunpack.c.0.s8 %v2579
      %v2581 = vlaneseq
      %v2582 = vshrl.u32 %v2581, 7
      %v2583 = vsub.s32 %v2580, %v2582
      %v2584 = vrot.slane %v2321, %v2583
      %v2586 = vunpack.c.l.s4 1983009808
      %v2587 = vunpack.c.0.s8 %v2586
      %v2588 = vlaneseq
      %v2589 = vshrl.u32 %v2588, 7
      %v2590 = vsub.s32 %v2587, %v2589
      %v2591 = vrot.slane %v2577, %v2590
      %v2592 = vcombine.high %v2584, %v2584
      %v2593 = vcombine.high %v2591, %v2591
      %v2594 = vcombine.high %v2326, %v2326
      %v2596 = vunpack.c.l.s4 1983009808
      %v2597 = vunpack.c.0.s8 %v2596
      %v2598 = vlaneseq
      %v2599 = vshrl.u32 %v2598, 7
      %v2600 = vsub.s32 %v2597, %v2599
      %v2601 = vrot.slane %v2326, %v2600
      %v2603 = vunpack.c.l.s4 1983009808
      %v2604 = vunpack.c.0.s8 %v2603
      %v2605 = vlaneseq
      %v2606 = vshrl.u32 %v2605, 7
      %v2607 = vsub.s32 %v2604, %v2606
      %v2608 = vrot.slane %v2594, %v2607
      %v2609 = vcombine.high %v2601, %v2601
      %v2610 = vcombine.high %v2608, %v2608
      %v2611 = vcombine.high %v2331, %v2331
      %v2613 = vunpack.c.l.s4 1983009808
      %v2614 = vunpack.c.0.s8 %v2613
      %v2615 = vlaneseq
      %v2616 = vshrl.u32 %v2615, 7
      %v2617 = vsub.s32 %v2614, %v2616
      %v2618 = vrot.slane %v2331, %v2617
      %v2620 = vunpack.c.l.s4 1983009808
      %v2621 = vunpack.c.0.s8 %v2620
      %v2622 = vlaneseq
      %v2623 = vshrl.u32 %v2622, 7
      %v2624 = vsub.s32 %v2621, %v2623
      %v2625 = vrot.slane %v2611, %v2624
      %v2626 = vcombine.high %v2618, %v2618
      %v2627 = vcombine.high %v2625, %v2625
      %v2628 = vcombine.high %v2336, %v2336
      %v2630 = vunpack.c.l.s4 1983009808
      %v2631 = vunpack.c.0.s8 %v2630
      %v2632 = vlaneseq
      %v2633 = vshrl.u32 %v2632, 7
      %v2634 = vsub.s32 %v2631, %v2633
      %v2635 = vrot.slane %v2336, %v2634
      %v2637 = vunpack.c.l.s4 1983009808
      %v2638 = vunpack.c.0.s8 %v2637
      %v2639 = vlaneseq
      %v2640 = vshrl.u32 %v2639, 7
      %v2641 = vsub.s32 %v2638, %v2640
      %v2642 = vrot.slane %v2628, %v2641
      %v2643 = vcombine.high %v2635, %v2635
      %v2644 = vcombine.high %v2642, %v2642
      %v2645 = vcombine.high %v2341, %v2341
      %v2647 = vunpack.c.l.s4 1983009808
      %v2648 = vunpack.c.0.s8 %v2647
      %v2649 = vlaneseq
      %v2650 = vshrl.u32 %v2649, 7
      %v2651 = vsub.s32 %v2648, %v2650
      %v2652 = vrot.slane %v2341, %v2651
      %v2654 = vunpack.c.l.s4 1983009808
      %v2655 = vunpack.c.0.s8 %v2654
      %v2656 = vlaneseq
      %v2657 = vshrl.u32 %v2656, 7
      %v2658 = vsub.s32 %v2655, %v2657
      %v2659 = vrot.slane %v2645, %v2658
      %v2660 = vcombine.high %v2652, %v2652
      %v2661 = vcombine.high %v2659, %v2659
      %v2662 = vcombine.high %v2346, %v2346
      %v2664 = vunpack.c.l.s4 1983009808
      %v2665 = vunpack.c.0.s8 %v2664
      %v2666 = vlaneseq
      %v2667 = vshrl.u32 %v2666, 7
      %v2668 = vsub.s32 %v2665, %v2667
      %v2669 = vrot.slane %v2346, %v2668
      %v2671 = vunpack.c.l.s4 1983009808
      %v2672 = vunpack.c.0.s8 %v2671
      %v2673 = vlaneseq
      %v2674 = vshrl.u32 %v2673, 7
      %v2675 = vsub.s32 %v2672, %v2674
      %v2676 = vrot.slane %v2662, %v2675
      %v2677 = vcombine.high %v2669, %v2669
      %v2678 = vcombine.high %v2676, %v2676
      %v2679 = vcombine.high %v2351, %v2351
      %v2681 = vunpack.c.l.s4 1983009808
      %v2682 = vunpack.c.0.s8 %v2681
      %v2683 = vlaneseq
      %v2684 = vshrl.u32 %v2683, 7
      %v2685 = vsub.s32 %v2682, %v2684
      %v2686 = vrot.slane %v2351, %v2685
      %v2688 = vunpack.c.l.s4 1983009808
      %v2689 = vunpack.c.0.s8 %v2688
      %v2690 = vlaneseq
      %v2691 = vshrl.u32 %v2690, 7
      %v2692 = vsub.s32 %v2689, %v2691
      %v2693 = vrot.slane %v2679, %v2692
      %v2694 = vcombine.high %v2686, %v2686
      %v2695 = vcombine.high %v2693, %v2693
      %v2696 = vcombine.high %v2356, %v2356
      %v2698 = vunpack.c.l.s4 1983009808
      %v2699 = vunpack.c.0.s8 %v2698
      %v2700 = vlaneseq
      %v2701 = vshrl.u32 %v2700, 7
      %v2702 = vsub.s32 %v2699, %v2701
      %v2703 = vrot.slane %v2356, %v2702
      %v2705 = vunpack.c.l.s4 1983009808
      %v2706 = vunpack.c.0.s8 %v2705
      %v2707 = vlaneseq
      %v2708 = vshrl.u32 %v2707, 7
      %v2709 = vsub.s32 %v2706, %v2708
      %v2710 = vrot.slane %v2696, %v2709
      %v2711 = vcombine.high %v2703, %v2703
      %v2712 = vcombine.high %v2710, %v2710
      %v2713 = vcombine.high %v2361, %v2361
      %v2715 = vunpack.c.l.s4 1983009808
      %v2716 = vunpack.c.0.s8 %v2715
      %v2717 = vlaneseq
      %v2718 = vshrl.u32 %v2717, 7
      %v2719 = vsub.s32 %v2716, %v2718
      %v2720 = vrot.slane %v2361, %v2719
      %v2722 = vunpack.c.l.s4 1983009808
      %v2723 = vunpack.c.0.s8 %v2722
      %v2724 = vlaneseq
      %v2725 = vshrl.u32 %v2724, 7
      %v2726 = vsub.s32 %v2723, %v2725
      %v2727 = vrot.slane %v2713, %v2726
      %v2728 = vcombine.high %v2720, %v2720
      %v2729 = vcombine.high %v2727, %v2727
      %v2730 = vcombine.high %v2366, %v2366
      %v2732 = vunpack.c.l.s4 1983009808
      %v2733 = vunpack.c.0.s8 %v2732
      %v2734 = vlaneseq
      %v2735 = vshrl.u32 %v2734, 7
      %v2736 = vsub.s32 %v2733, %v2735
      %v2737 = vrot.slane %v2366, %v2736
      %v2739 = vunpack.c.l.s4 1983009808
      %v2740 = vunpack.c.0.s8 %v2739
      %v2741 = vlaneseq
      %v2742 = vshrl.u32 %v2741, 7
      %v2743 = vsub.s32 %v2740, %v2742
      %v2744 = vrot.slane %v2730, %v2743
      %v2745 = vcombine.high %v2737, %v2737
      %v2746 = vcombine.high %v2744, %v2744
      %v2747 = vcombine.high %v2371, %v2371
      %v2749 = vunpack.c.l.s4 1983009808
      %v2750 = vunpack.c.0.s8 %v2749
      %v2751 = vlaneseq
      %v2752 = vshrl.u32 %v2751, 7
      %v2753 = vsub.s32 %v2750, %v2752
      %v2754 = vrot.slane %v2371, %v2753
      %v2756 = vunpack.c.l.s4 1983009808
      %v2757 = vunpack.c.0.s8 %v2756
      %v2758 = vlaneseq
      %v2759 = vshrl.u32 %v2758, 7
      %v2760 = vsub.s32 %v2757, %v2759
      %v2761 = vrot.slane %v2747, %v2760
      %v2762 = vcombine.high %v2754, %v2754
      %v2763 = vcombine.high %v2761, %v2761
      %v2764 = vcombine.high %v2376, %v2376
      %v2766 = vunpack.c.l.s4 1983009808
      %v2767 = vunpack.c.0.s8 %v2766
      %v2768 = vlaneseq
      %v2769 = vshrl.u32 %v2768, 7
      %v2770 = vsub.s32 %v2767, %v2769
      %v2771 = vrot.slane %v2376, %v2770
      %v2773 = vunpack.c.l.s4 1983009808
      %v2774 = vunpack.c.0.s8 %v2773
      %v2775 = vlaneseq
      %v2776 = vshrl.u32 %v2775, 7
      %v2777 = vsub.s32 %v2774, %v2776
      %v2778 = vrot.slane %v2764, %v2777
      %v2779 = vcombine.high %v2771, %v2771
      %v2780 = vcombine.high %v2778, %v2778
      %v2781 = vcombine.high %v2381, %v2381
      %v2783 = vunpack.c.l.s4 1983009808
      %v2784 = vunpack.c.0.s8 %v2783
      %v2785 = vlaneseq
      %v2786 = vshrl.u32 %v2785, 7
      %v2787 = vsub.s32 %v2784, %v2786
      %v2788 = vrot.slane %v2381, %v2787
      %v2790 = vunpack.c.l.s4 1983009808
      %v2791 = vunpack.c.0.s8 %v2790
      %v2792 = vlaneseq
      %v2793 = vshrl.u32 %v2792, 7
      %v2794 = vsub.s32 %v2791, %v2793
      %v2795 = vrot.slane %v2781, %v2794
      %v2796 = vcombine.high %v2788, %v2788
      %v2797 = vcombine.high %v2795, %v2795
      %v2798 = vcombine.high %v2386, %v2386
      %v2800 = vunpack.c.l.s4 1983009808
      %v2801 = vunpack.c.0.s8 %v2800
      %v2802 = vlaneseq
      %v2803 = vshrl.u32 %v2802, 7
      %v2804 = vsub.s32 %v2801, %v2803
      %v2805 = vrot.slane %v2386, %v2804
      %v2807 = vunpack.c.l.s4 1983009808
      %v2808 = vunpack.c.0.s8 %v2807
      %v2809 = vlaneseq
      %v2810 = vshrl.u32 %v2809, 7
      %v2811 = vsub.s32 %v2808, %v2810
      %v2812 = vrot.slane %v2798, %v2811
      %v2813 = vcombine.high %v2805, %v2805
      %v2814 = vcombine.high %v2812, %v2812
      %v2815 = vcombine.high %v2391, %v2391
      %v2817 = vunpack.c.l.s4 1983009808
      %v2818 = vunpack.c.0.s8 %v2817
      %v2819 = vlaneseq
      %v2820 = vshrl.u32 %v2819, 7
      %v2821 = vsub.s32 %v2818, %v2820
      %v2822 = vrot.slane %v2391, %v2821
      %v2824 = vunpack.c.l.s4 1983009808
      %v2825 = vunpack.c.0.s8 %v2824
      %v2826 = vlaneseq
      %v2827 = vshrl.u32 %v2826, 7
      %v2828 = vsub.s32 %v2825, %v2827
      %v2829 = vrot.slane %v2815, %v2828
      %v2830 = vcombine.high %v2822, %v2822
      %v2831 = vcombine.high %v2829, %v2829
      %v2833 = vunpack.c.l.s4 1983009808
      %v2834 = vunpack.c.0.s8 %v2833
      %v2835 = vlaneseq
      %v2836 = vshrl.u32 %v2835, 7
      %v2837 = vsub.s32 %v2834, %v2836
      %v2838 = vrot.slane %v2396, %v2837
      %v2839 = vcombine.high %v2838, %v2838
      %v2840 = vcombine.low %v2431, %v2439
      %v2841 = vcombine.low %v2438, %v2440
      %v2843 = vunpack.c.l.s4 1983009808
      %v2844 = vunpack.c.0.s8 %v2843
      %v2845 = vlaneseq
      %v2846 = vshrl.u32 %v2845, 7
      %v2847 = vsub.s32 %v2844, %v2846
      %v2848 = vrot.slane %v2840, %v2847
      %v2850 = vunpack.c.l.s4 1983009808
      %v2851 = vunpack.c.0.s8 %v2850
      %v2852 = vlaneseq
      %v2853 = vshrl.u32 %v2852, 7
      %v2854 = vsub.s32 %v2851, %v2853
      %v2855 = vrot.slane %v2841, %v2854
      %v2856 = vcombine.low %v2848, %v2855
      %v2857 = vcombine.low %v2448, %v2456
      %v2859 = vunpack.c.l.s4 1983009808
      %v2860 = vunpack.c.0.s8 %v2859
      %v2861 = vlaneseq
      %v2862 = vshrl.u32 %v2861, 7
      %v2863 = vsub.s32 %v2860, %v2862
      %v2864 = vrot.slane %v2857, %v2863
      %v2866 = vunpack.c.l.s4 1983009808
      %v2867 = vunpack.c.0.s8 %v2866
      %v2868 = vlaneseq
      %v2869 = vshrl.u32 %v2868, 7
      %v2870 = vsub.s32 %v2867, %v2869
      %v2871 = vrot.slane %v2455, %v2870
      %v2872 = vcombine.low %v2864, %v2871
      %v2873 = vcombine.low %v2457, %v2465
      %v2874 = vcombine.low %v2473, %v2472
      %v2876 = vunpack.c.l.s4 1983009808
      %v2877 = vunpack.c.0.s8 %v2876
      %v2878 = vlaneseq
      %v2879 = vshrl.u32 %v2878, 7
      %v2880 = vsub.s32 %v2877, %v2879
      %v2881 = vrot.slane %v2873, %v2880
      %v2883 = vunpack.c.l.s4 1983009808
      %v2884 = vunpack.c.0.s8 %v2883
      %v2885 = vlaneseq
      %v2886 = vshrl.u32 %v2885, 7
      %v2887 = vsub.s32 %v2884, %v2886
      %v2888 = vrot.slane %v2874, %v2887
      %v2889 = vcombine.low %v2881, %v2888
      %v2890 = vcombine.low %v2474, %v2482
      %v2892 = vunpack.c.l.s4 1983009808
      %v2893 = vunpack.c.0.s8 %v2892
      %v2894 = vlaneseq
      %v2895 = vshrl.u32 %v2894, 7
      %v2896 = vsub.s32 %v2893, %v2895
      %v2897 = vrot.slane %v2890, %v2896
      %v2899 = vunpack.c.l.s4 1983009808
      %v2900 = vunpack.c.0.s8 %v2899
      %v2901 = vlaneseq
      %v2902 = vshrl.u32 %v2901, 7
      %v2903 = vsub.s32 %v2900, %v2902
      %v2904 = vrot.slane %v2490, %v2903
      %v2905 = vcombine.low %v2897, %v2904
      %v2906 = vcombine.low %v2489, %v2491
      %v2907 = vcombine.low %v2499, %v2507
      %v2909 = vunpack.c.l.s4 1983009808
      %v2910 = vunpack.c.0.s8 %v2909
      %v2911 = vlaneseq
      %v2912 = vshrl.u32 %v2911, 7
      %v2913 = vsub.s32 %v2910, %v2912
      %v2914 = vrot.slane %v2906, %v2913
      %v2916 = vunpack.c.l.s4 1983009808
      %v2917 = vunpack.c.0.s8 %v2916
      %v2918 = vlaneseq
      %v2919 = vshrl.u32 %v2918, 7
      %v2920 = vsub.s32 %v2917, %v2919
      %v2921 = vrot.slane %v2907, %v2920
      %v2922 = vcombine.low %v2914, %v2921
      %v2923 = vcombine.low %v2506, %v2508
      %v2925 = vunpack.c.l.s4 1983009808
      %v2926 = vunpack.c.0.s8 %v2925
      %v2927 = vlaneseq
      %v2928 = vshrl.u32 %v2927, 7
      %v2929 = vsub.s32 %v2926, %v2928
      %v2930 = vrot.slane %v2923, %v2929
      %v2932 = vunpack.c.l.s4 1983009808
      %v2933 = vunpack.c.0.s8 %v2932
      %v2934 = vlaneseq
      %v2935 = vshrl.u32 %v2934, 7
      %v2936 = vsub.s32 %v2933, %v2935
      %v2937 = vrot.slane %v2516, %v2936
      %v2938 = vcombine.low %v2930, %v2937
      %v2939 = vcombine.low %v2524, %v2523
      %v2940 = vcombine.low %v2525, %v2533
      %v2942 = vunpack.c.l.s4 1983009808
      %v2943 = vunpack.c.0.s8 %v2942
      %v2944 = vlaneseq
      %v2945 = vshrl.u32 %v2944, 7
      %v2946 = vsub.s32 %v2943, %v2945
      %v2947 = vrot.slane %v2939, %v2946
      %v2949 = vunpack.c.l.s4 1983009808
      %v2950 = vunpack.c.0.s8 %v2949
      %v2951 = vlaneseq
      %v2952 = vshrl.u32 %v2951, 7
      %v2953 = vsub.s32 %v2950, %v2952
      %v2954 = vrot.slane %v2940, %v2953
      %v2955 = vcombine.low %v2947, %v2954
      %v2956 = vcombine.low %v2541, %v2540
      %v2958 = vunpack.c.l.s4 1983009808
      %v2959 = vunpack.c.0.s8 %v2958
      %v2960 = vlaneseq
      %v2961 = vshrl.u32 %v2960, 7
      %v2962 = vsub.s32 %v2959, %v2961
      %v2963 = vrot.slane %v2956, %v2962
      %v2965 = vunpack.c.l.s4 1983009808
      %v2966 = vunpack.c.0.s8 %v2965
      %v2967 = vlaneseq
      %v2968 = vshrl.u32 %v2967, 7
      %v2969 = vsub.s32 %v2966, %v2968
      %v2970 = vrot.slane %v2542, %v2969
      %v2971 = vcombine.low %v2963, %v2970
      %v2972 = vcombine.low %v2550, %v2558
      %v2973 = vcombine.low %v2557, %v2559
      %v2975 = vunpack.c.l.s4 1983009808
      %v2976 = vunpack.c.0.s8 %v2975
      %v2977 = vlaneseq
      %v2978 = vshrl.u32 %v2977, 7
      %v2979 = vsub.s32 %v2976, %v2978
      %v2980 = vrot.slane %v2972, %v2979
      %v2982 = vunpack.c.l.s4 1983009808
      %v2983 = vunpack.c.0.s8 %v2982
      %v2984 = vlaneseq
      %v2985 = vshrl.u32 %v2984, 7
      %v2986 = vsub.s32 %v2983, %v2985
      %v2987 = vrot.slane %v2973, %v2986
      %v2988 = vcombine.low %v2980, %v2987
      %v2989 = vcombine.low %v2567, %v2575
      %v2991 = vunpack.c.l.s4 1983009808
      %v2992 = vunpack.c.0.s8 %v2991
      %v2993 = vlaneseq
      %v2994 = vshrl.u32 %v2993, 7
      %v2995 = vsub.s32 %v2992, %v2994
      %v2996 = vrot.slane %v2989, %v2995
      %v2998 = vunpack.c.l.s4 1983009808
      %v2999 = vunpack.c.0.s8 %v2998
      %v3000 = vlaneseq
      %v3001 = vshrl.u32 %v3000, 7
      %v3002 = vsub.s32 %v2999, %v3001
      %v3003 = vrot.slane %v2574, %v3002
      %v3004 = vcombine.low %v2996, %v3003
      %v3005 = vcombine.low %v2576, %v2584
      %v3006 = vcombine.low %v2592, %v2591
      %v3008 = vunpack.c.l.s4 1983009808
      %v3009 = vunpack.c.0.s8 %v3008
      %v3010 = vlaneseq
      %v3011 = vshrl.u32 %v3010, 7
      %v3012 = vsub.s32 %v3009, %v3011
      %v3013 = vrot.slane %v3005, %v3012
      %v3015 = vunpack.c.l.s4 1983009808
      %v3016 = vunpack.c.0.s8 %v3015
      %v3017 = vlaneseq
      %v3018 = vshrl.u32 %v3017, 7
      %v3019 = vsub.s32 %v3016, %v3018
      %v3020 = vrot.slane %v3006, %v3019
      %v3021 = vcombine.low %v3013, %v3020
      %v3022 = vcombine.low %v2593, %v2601
      %v3024 = vunpack.c.l.s4 1983009808
      %v3025 = vunpack.c.0.s8 %v3024
      %v3026 = vlaneseq
      %v3027 = vshrl.u32 %v3026, 7
      %v3028 = vsub.s32 %v3025, %v3027
      %v3029 = vrot.slane %v3022, %v3028
      %v3031 = vunpack.c.l.s4 1983009808
      %v3032 = vunpack.c.0.s8 %v3031
      %v3033 = vlaneseq
      %v3034 = vshrl.u32 %v3033, 7
      %v3035 = vsub.s32 %v3032, %v3034
      %v3036 = vrot.slane %v2609, %v3035
      %v3037 = vcombine.low %v3029, %v3036
      %v3038 = vcombine.low %v2608, %v2610
      %v3039 = vcombine.low %v2618, %v2626
      %v3041 = vunpack.c.l.s4 1983009808
      %v3042 = vunpack.c.0.s8 %v3041
      %v3043 = vlaneseq
      %v3044 = vshrl.u32 %v3043, 7
      %v3045 = vsub.s32 %v3042, %v3044
      %v3046 = vrot.slane %v3038, %v3045
      %v3048 = vunpack.c.l.s4 1983009808
      %v3049 = vunpack.c.0.s8 %v3048
      %v3050 = vlaneseq
      %v3051 = vshrl.u32 %v3050, 7
      %v3052 = vsub.s32 %v3049, %v3051
      %v3053 = vrot.slane %v3039, %v3052
      %v3054 = vcombine.low %v3046, %v3053
      %v3055 = vcombine.low %v2625, %v2627
      %v3057 = vunpack.c.l.s4 1983009808
      %v3058 = vunpack.c.0.s8 %v3057
      %v3059 = vlaneseq
      %v3060 = vshrl.u32 %v3059, 7
      %v3061 = vsub.s32 %v3058, %v3060
      %v3062 = vrot.slane %v3055, %v3061
      %v3064 = vunpack.c.l.s4 1983009808
      %v3065 = vunpack.c.0.s8 %v3064
      %v3066 = vlaneseq
      %v3067 = vshrl.u32 %v3066, 7
      %v3068 = vsub.s32 %v3065, %v3067
      %v3069 = vrot.slane %v2635, %v3068
      %v3070 = vcombine.low %v3062, %v3069
      %v3071 = vcombine.low %v2643, %v2642
      %v3072 = vcombine.low %v2644, %v2652
      %v3074 = vunpack.c.l.s4 1983009808
      %v3075 = vunpack.c.0.s8 %v3074
      %v3076 = vlaneseq
      %v3077 = vshrl.u32 %v3076, 7
      %v3078 = vsub.s32 %v3075, %v3077
      %v3079 = vrot.slane %v3071, %v3078
      %v3081 = vunpack.c.l.s4 1983009808
      %v3082 = vunpack.c.0.s8 %v3081
      %v3083 = vlaneseq
      %v3084 = vshrl.u32 %v3083, 7
      %v3085 = vsub.s32 %v3082, %v3084
      %v3086 = vrot.slane %v3072, %v3085
      %v3087 = vcombine.low %v3079, %v3086
      %v3088 = vcombine.low %v2660, %v2659
      %v3090 = vunpack.c.l.s4 1983009808
      %v3091 = vunpack.c.0.s8 %v3090
      %v3092 = vlaneseq
      %v3093 = vshrl.u32 %v3092, 7
      %v3094 = vsub.s32 %v3091, %v3093
      %v3095 = vrot.slane %v3088, %v3094
      %v3097 = vunpack.c.l.s4 1983009808
      %v3098 = vunpack.c.0.s8 %v3097
      %v3099 = vlaneseq
      %v3100 = vshrl.u32 %v3099, 7
      %v3101 = vsub.s32 %v3098, %v3100
      %v3102 = vrot.slane %v2661, %v3101
      %v3103 = vcombine.low %v3095, %v3102
      %v3104 = vcombine.low %v2669, %v2677
      %v3105 = vcombine.low %v2676, %v2678
      %v3107 = vunpack.c.l.s4 1983009808
      %v3108 = vunpack.c.0.s8 %v3107
      %v3109 = vlaneseq
      %v3110 = vshrl.u32 %v3109, 7
      %v3111 = vsub.s32 %v3108, %v3110
      %v3112 = vrot.slane %v3104, %v3111
      %v3114 = vunpack.c.l.s4 1983009808
      %v3115 = vunpack.c.0.s8 %v3114
      %v3116 = vlaneseq
      %v3117 = vshrl.u32 %v3116, 7
      %v3118 = vsub.s32 %v3115, %v3117
      %v3119 = vrot.slane %v3105, %v3118
      %v3120 = vcombine.low %v3112, %v3119
      %v3121 = vcombine.low %v2686, %v2694
      %v3123 = vunpack.c.l.s4 1983009808
      %v3124 = vunpack.c.0.s8 %v3123
      %v3125 = vlaneseq
      %v3126 = vshrl.u32 %v3125, 7
      %v3127 = vsub.s32 %v3124, %v3126
      %v3128 = vrot.slane %v3121, %v3127
      %v3130 = vunpack.c.l.s4 1983009808
      %v3131 = vunpack.c.0.s8 %v3130
      %v3132 = vlaneseq
      %v3133 = vshrl.u32 %v3132, 7
      %v3134 = vsub.s32 %v3131, %v3133
      %v3135 = vrot.slane %v2693, %v3134
      %v3136 = vcombine.low %v3128, %v3135
      %v3137 = vcombine.low %v2695, %v2703
      %v3138 = vcombine.low %v2711, %v2710
      %v3140 = vunpack.c.l.s4 1983009808
      %v3141 = vunpack.c.0.s8 %v3140
      %v3142 = vlaneseq
      %v3143 = vshrl.u32 %v3142, 7
      %v3144 = vsub.s32 %v3141, %v3143
      %v3145 = vrot.slane %v3137, %v3144
      %v3147 = vunpack.c.l.s4 1983009808
      %v3148 = vunpack.c.0.s8 %v3147
      %v3149 = vlaneseq
      %v3150 = vshrl.u32 %v3149, 7
      %v3151 = vsub.s32 %v3148, %v3150
      %v3152 = vrot.slane %v3138, %v3151
      %v3153 = vcombine.low %v3145, %v3152
      %v3154 = vcombine.low %v2712, %v2720
      %v3156 = vunpack.c.l.s4 1983009808
      %v3157 = vunpack.c.0.s8 %v3156
      %v3158 = vlaneseq
      %v3159 = vshrl.u32 %v3158, 7
      %v3160 = vsub.s32 %v3157, %v3159
      %v3161 = vrot.slane %v3154, %v3160
      %v3163 = vunpack.c.l.s4 1983009808
      %v3164 = vunpack.c.0.s8 %v3163
      %v3165 = vlaneseq
      %v3166 = vshrl.u32 %v3165, 7
      %v3167 = vsub.s32 %v3164, %v3166
      %v3168 = vrot.slane %v2728, %v3167
      %v3169 = vcombine.low %v3161, %v3168
      %v3170 = vcombine.low %v2727, %v2729
      %v3171 = vcombine.low %v2737, %v2745
      %v3173 = vunpack.c.l.s4 1983009808
      %v3174 = vunpack.c.0.s8 %v3173
      %v3175 = vlaneseq
      %v3176 = vshrl.u32 %v3175, 7
      %v3177 = vsub.s32 %v3174, %v3176
      %v3178 = vrot.slane %v3170, %v3177
      %v3180 = vunpack.c.l.s4 1983009808
      %v3181 = vunpack.c.0.s8 %v3180
      %v3182 = vlaneseq
      %v3183 = vshrl.u32 %v3182, 7
      %v3184 = vsub.s32 %v3181, %v3183
      %v3185 = vrot.slane %v3171, %v3184
      %v3186 = vcombine.low %v3178, %v3185
      %v3187 = vcombine.low %v2744, %v2746
      %v3189 = vunpack.c.l.s4 1983009808
      %v3190 = vunpack.c.0.s8 %v3189
      %v3191 = vlaneseq
      %v3192 = vshrl.u32 %v3191, 7
      %v3193 = vsub.s32 %v3190, %v3192
      %v3194 = vrot.slane %v3187, %v3193
      %v3196 = vunpack.c.l.s4 1983009808
      %v3197 = vunpack.c.0.s8 %v3196
      %v3198 = vlaneseq
      %v3199 = vshrl.u32 %v3198, 7
      %v3200 = vsub.s32 %v3197, %v3199
      %v3201 = vrot.slane %v2754, %v3200
      %v3202 = vcombine.low %v3194, %v3201
      %v3203 = vcombine.low %v2762, %v2761
      %v3204 = vcombine.low %v2763, %v2771
      %v3206 = vunpack.c.l.s4 1983009808
      %v3207 = vunpack.c.0.s8 %v3206
      %v3208 = vlaneseq
      %v3209 = vshrl.u32 %v3208, 7
      %v3210 = vsub.s32 %v3207, %v3209
      %v3211 = vrot.slane %v3203, %v3210
      %v3213 = vunpack.c.l.s4 1983009808
      %v3214 = vunpack.c.0.s8 %v3213
      %v3215 = vlaneseq
      %v3216 = vshrl.u32 %v3215, 7
      %v3217 = vsub.s32 %v3214, %v3216
      %v3218 = vrot.slane %v3204, %v3217
      %v3219 = vcombine.low %v3211, %v3218
      %v3220 = vcombine.low %v2779, %v2778
      %v3222 = vunpack.c.l.s4 1983009808
      %v3223 = vunpack.c.0.s8 %v3222
      %v3224 = vlaneseq
      %v3225 = vshrl.u32 %v3224, 7
      %v3226 = vsub.s32 %v3223, %v3225
      %v3227 = vrot.slane %v3220, %v3226
      %v3229 = vunpack.c.l.s4 1983009808
      %v3230 = vunpack.c.0.s8 %v3229
      %v3231 = vlaneseq
      %v3232 = vshrl.u32 %v3231, 7
      %v3233 = vsub.s32 %v3230, %v3232
      %v3234 = vrot.slane %v2780, %v3233
      %v3235 = vcombine.low %v3227, %v3234
      %v3236 = vcombine.low %v2788, %v2796
      %v3237 = vcombine.low %v2795, %v2797
      %v3239 = vunpack.c.l.s4 1983009808
      %v3240 = vunpack.c.0.s8 %v3239
      %v3241 = vlaneseq
      %v3242 = vshrl.u32 %v3241, 7
      %v3243 = vsub.s32 %v3240, %v3242
      %v3244 = vrot.slane %v3236, %v3243
      %v3246 = vunpack.c.l.s4 1983009808
      %v3247 = vunpack.c.0.s8 %v3246
      %v3248 = vlaneseq
      %v3249 = vshrl.u32 %v3248, 7
      %v3250 = vsub.s32 %v3247, %v3249
      %v3251 = vrot.slane %v3237, %v3250
      %v3252 = vcombine.low %v3244, %v3251
      %v3253 = vcombine.low %v2805, %v2813
      %v3255 = vunpack.c.l.s4 1983009808
      %v3256 = vunpack.c.0.s8 %v3255
      %v3257 = vlaneseq
      %v3258 = vshrl.u32 %v3257, 7
      %v3259 = vsub.s32 %v3256, %v3258
      %v3260 = vrot.slane %v3253, %v3259
      %v3262 = vunpack.c.l.s4 1983009808
      %v3263 = vunpack.c.0.s8 %v3262
      %v3264 = vlaneseq
      %v3265 = vshrl.u32 %v3264, 7
      %v3266 = vsub.s32 %v3263, %v3265
      %v3267 = vrot.slane %v2812, %v3266
      %v3268 = vcombine.low %v3260, %v3267
      %v3269 = vcombine.low %v2814, %v2822
      %v3270 = vcombine.low %v2830, %v2829
      %v3272 = vunpack.c.l.s4 1983009808
      %v3273 = vunpack.c.0.s8 %v3272
      %v3274 = vlaneseq
      %v3275 = vshrl.u32 %v3274, 7
      %v3276 = vsub.s32 %v3273, %v3275
      %v3277 = vrot.slane %v3269, %v3276
      %v3279 = vunpack.c.l.s4 1983009808
      %v3280 = vunpack.c.0.s8 %v3279
      %v3281 = vlaneseq
      %v3282 = vshrl.u32 %v3281, 7
      %v3283 = vsub.s32 %v3280, %v3282
      %v3284 = vrot.slane %v3270, %v3283
      %v3285 = vcombine.low %v3277, %v3284
      %v3286 = vcombine.low %v2831, %v2838
      %v3288 = vunpack.c.l.s4 1983009808
      %v3289 = vunpack.c.0.s8 %v3288
      %v3290 = vlaneseq
      %v3291 = vshrl.u32 %v3290, 7
      %v3292 = vsub.s32 %v3289, %v3291
      %v3293 = vrot.slane %v3286, %v3292
      %v3295 = vunpack.c.l.s4 1983009808
      %v3296 = vunpack.c.0.s8 %v3295
      %v3297 = vlaneseq
      %v3298 = vshrl.u32 %v3297, 7
      %v3299 = vsub.s32 %v3296, %v3298
      %v3300 = vrot.slane %v2839, %v3299
      %v3301 = vcombine.low %v3293, %v3300
      %vm3330 = vcmask 523264
      %3331 = vst.msk [vmem:[%s170] sm:$0xff] %vm3330, %v2856
      %vm3332 = vcmask 521216
      %3333 = vst.msk [vmem:[%s170 + $0x8] sm:$0x3f] %vm3332, %v2872
      %3334 = vst.msk [vmem:[%s170 + $0x10] sm:$0xff] %vm3330, %v2889
      %3335 = vst.msk [vmem:[%s170 + $0x18] sm:$0x3f] %vm3332, %v2905
      %3336 = vst.msk [vmem:[%s170 + $0x20] sm:$0xff] %vm3330, %v2922
      %3337 = vst.msk [vmem:[%s170 + $0x28] sm:$0x3f] %vm3332, %v2938
      %3338 = vst.msk [vmem:[%s170 + $0x30] sm:$0xff] %vm3330, %v2955
      %3339 = vst.msk [vmem:[%s170 + $0x38] sm:$0x3f] %vm3332, %v2971
      %3340 = vst.msk [vmem:[%s170 + $0x40] sm:$0xff] %vm3330, %v2988
      %3341 = vst.msk [vmem:[%s170 + $0x48] sm:$0x3f] %vm3332, %v3004
      %3342 = vst.msk [vmem:[%s170 + $0x50] sm:$0xff] %vm3330, %v3021
      %3343 = vst.msk [vmem:[%s170 + $0x58] sm:$0x3f] %vm3332, %v3037
      %3344 = vst.msk [vmem:[%s170 + $0x60] sm:$0xff] %vm3330, %v3054
      %3345 = vst.msk [vmem:[%s170 + $0x68] sm:$0x3f] %vm3332, %v3070
      %3346 = vst.msk [vmem:[%s170 + $0x70] sm:$0xff] %vm3330, %v3087
      %3347 = vst.msk [vmem:[%s170 + $0x78] sm:$0x3f] %vm3332, %v3103
      %3348 = vst.msk [vmem:[%s170 + $0x80] sm:$0xff] %vm3330, %v3120
      %3349 = vst.msk [vmem:[%s170 + $0x88] sm:$0x3f] %vm3332, %v3136
      %3350 = vst.msk [vmem:[%s170 + $0x90] sm:$0xff] %vm3330, %v3153
      %3351 = vst.msk [vmem:[%s170 + $0x98] sm:$0x3f] %vm3332, %v3169
      %3352 = vst.msk [vmem:[%s170 + $0xa0] sm:$0xff] %vm3330, %v3186
      %3353 = vst.msk [vmem:[%s170 + $0xa8] sm:$0x3f] %vm3332, %v3202
      %3354 = vst.msk [vmem:[%s170 + $0xb0] sm:$0xff] %vm3330, %v3219
      %3355 = vst.msk [vmem:[%s170 + $0xb8] sm:$0x3f] %vm3332, %v3235
      %3356 = vst.msk [vmem:[%s170 + $0xc0] sm:$0xff] %vm3330, %v3252
      %3357 = vst.msk [vmem:[%s170 + $0xc8] sm:$0x3f] %vm3332, %v3268
      %3358 = vst.msk [vmem:[%s170 + $0xd0] sm:$0xff] %vm3330, %v3285
      %3359 = vst.msk [vmem:[%s170 + $0xd8] sm:$0x3f] %vm3332, %v3301
      %p3360 = scmp.lt.s32.totalorder %s14, 1
      %s3361 = scalar_select %p3360, %s14, 1
      %s3362 = smul.addr %s3361, 28
      %s3363 = smul.addr %s3362, 8
      %s3364 = scalar_lea.vmem %s3, %s3363
      // Predicated region
      $region33: #{tpu_custom_call.1} parent=31 // pred_check
        %p3365 = pneg %p100
      $region34: #{tpu_custom_call.1} parent=31 // pred_check_branch
        %3367 = sbr.rel (%p3365) target = $region36
      $region35: #{tpu_custom_call.1} parent=31 // pred_region
        _
      $region36: #{tpu_custom_call.1} parent=31 // pred_fallthru
        _
    $region32: #{tpu_custom_call.1} parent=5 // pred_fallthru
      _
    %p3368 = scmp.le.s32.totalorder 2, %s9
    // Predicated region
    $region37: #{tpu_custom_call.1} parent=5 // pred_check
      %p3369 = pneg %p3368
    $region38: #{tpu_custom_call.1} parent=5 // pred_check_branch
      %3371 = sbr.rel (%p3369) target = $region40
    $region39: #{tpu_custom_call.1} parent=5 // pred_region
      %s3372 = ssub.s32 %s9, 2
      // Predicated region
      $region41: #{tpu_custom_call.1} parent=39 // pred_check
        %p3373 = pneg %p106
      $region42: #{tpu_custom_call.1} parent=39 // pred_check_branch
        %3375 = sbr.rel (%p3373) target = $region44
      $region43: #{tpu_custom_call.1} parent=39 // pred_region
        %p3376 = scmp.lt.s32.totalorder %s15, 1
        %s3377 = scalar_select %p3376, %s15, 1
        %s3378 = smul.addr %s3377, 28
        %s3379 = smul.addr %s3378, 8
        %s3380 = scalar_lea.vmem %s3, %s3379
      $region44: #{tpu_custom_call.1} parent=39 // pred_fallthru
        _
    $region40: #{tpu_custom_call.1} parent=5 // pred_fallthru
      _
  $region6: #{tpu_custom_call.1} parent=0 // loop_footer
    %s13 = sadd.s32 1, %s9
  $region7: #{tpu_custom_call.1} parent=0 // loop_footer_branch
    %8 = sbr.rel target = $region3
  $region8: #{tpu_custom_call.1} parent=0 // loop_exit
    _

</llo_original>
